<compile_context>
chip_gen: v5e
topology: v5e:2x2
jax: 0.10.0
libtpu: 0.0.40
codegen_flags: <defaults>
</compile_context>

<pallas_src>
import functools
import math

import jax
import jax.numpy as jnp
from jax.experimental import pallas as pl
from jax.experimental.pallas import tpu as pltpu


# Row layout of the packed (L, 16, D) bias/LayerNorm array.
_BQ, _BK, _BV, _BO, _LN1W, _LN1B, _B2, _LN2W, _LN2B = range(9)


def _layernorm(x, w, b, eps=1e-5):
    # rsqrt -> EUP slot instead of a VALU divide.
    mu = jnp.mean(x, axis=-1, keepdims=True)
    var = jnp.mean((x - mu) ** 2, axis=-1, keepdims=True)
    return (x - mu) * jax.lax.rsqrt(var + eps) * w + b


def encoder_kernel(nhead, bt, q_tile, exp_dtype,
                   x_ref, pos_ref,
                   wq_ref, wk_ref, wv_ref, wo_ref, w1_ref, w2_ref,
                   vd_ref, vf_ref,
                   out_ref, x_scr):
    """grid = (batch_block, layer); x_scr carries (bt, S, D) activations across layers."""
    layer = pl.program_id(1)

    @pl.when(layer == 0)
    def _init():
        x_scr[...] = x_ref[...].astype(jnp.float32)

    _, S, D = x_scr.shape
    H = nhead
    hd = D // H
    bf16 = jnp.bfloat16
    scale = 1.0 / math.sqrt(hd)

    # Current layer parameters (weights bf16; packed bias/LN vectors f32).
    wq, wk, wv, wo = wq_ref[0], wk_ref[0], wv_ref[0], wo_ref[0]     # (D, D)
    w1, w2 = w1_ref[0], w2_ref[0]                                   # (D, F), (F, D)
    vd = vd_ref[0]                                                  # (16, D)
    bq, bk = vd[_BQ:_BQ + 1], vd[_BK:_BK + 1]
    bv, bo = vd[_BV:_BV + 1], vd[_BO:_BO + 1]
    ln1w, ln1b = vd[_LN1W:_LN1W + 1], vd[_LN1B:_LN1B + 1]
    b2 = vd[_B2:_B2 + 1]
    ln2w, ln2b = vd[_LN2W:_LN2W + 1], vd[_LN2B:_LN2B + 1]
    b1 = vf_ref[0][0:1]                                             # (1, F)

    def split_heads(t2d, rows):      # (bt*rows, D) -> (bt*H, rows, hd)
        t = t2d.reshape(bt, rows, H, hd)
        return jnp.transpose(t, (0, 2, 1, 3)).reshape(bt * H, rows, hd)

    def merge_heads(t, rows):        # (bt*H, rows, hd) -> (bt*rows, D)
        t = t.reshape(bt, H, rows, hd)
        return jnp.transpose(t, (0, 2, 1, 3)).reshape(bt * rows, D)

    # ---- Full-sequence K / V (needed by every query tile); contraction depth = D. ----
    x_full = x_scr[...]                               # (bt, S, D) f32
    pos_full = pos_ref[...].astype(jnp.float32)
    qk_in = (x_full + pos_full).astype(bf16).reshape(bt * S, D)
    x16 = x_full.astype(bf16).reshape(bt * S, D)
    k = jnp.dot(qk_in, wk, preferred_element_type=jnp.float32) + bk
    v = jnp.dot(x16, wv, preferred_element_type=jnp.float32) + bv
    kh = split_heads(k.astype(bf16), S)               # (bt*H, S, hd) bf16
    vh = split_heads(v.astype(bf16), S)

    # ---- Query-tiled attention + FFN; each tile is written back into x_scr in place ----
    # (safe: later tiles only read their own, not-yet-overwritten rows plus kh/vh above).
    def q_tile_body(start):
        rows = q_tile
        x_t = x_scr[:, pl.ds(start, rows), :]                        # (bt, rows, D) f32
        pos_t = pos_ref[:, pl.ds(start, rows), :].astype(jnp.float32)
        x_t2 = x_t.reshape(bt * rows, D)

        qin = (x_t + pos_t).astype(bf16).reshape(bt * rows, D)
        q = jnp.dot(qin, wq, preferred_element_type=jnp.float32) + bq
        qh = split_heads((q * scale).astype(bf16), rows)             # (bt*H, rows, hd)

        s = jnp.einsum("bqd,bkd->bqk", qh, kh,
                       preferred_element_type=jnp.float32)           # (bt*H, rows, S)
        s = s - jnp.max(s, axis=-1, keepdims=True)
        p = jnp.exp(s.astype(exp_dtype))                             # bf16 exp on v6e/v7x
        l = jnp.sum(p, axis=-1, keepdims=True, dtype=jnp.float32)
        o = jnp.einsum("bqk,bkd->bqd", p.astype(bf16), vh,
                       preferred_element_type=jnp.float32)           # (bt*H, rows, hd)
        o = o * pl.reciprocal(l, approx=True)                        # normalize after PV
        o2 = merge_heads(o, rows)                                    # (bt*rows, D) f32

        attn = jnp.dot(o2.astype(bf16), wo, preferred_element_type=jnp.float32) + bo
        x1 = _layernorm(x_t2 + attn, ln1w, ln1b)

        h1 = jnp.maximum(
            jnp.dot(x1.astype(bf16), w1, preferred_element_type=jnp.float32) + b1, 0.0)
        h2 = jnp.dot(h1.astype(bf16), w2, preferred_element_type=jnp.float32) + b2
        x2 = _layernorm(x1 + h2, ln2w, ln2b)

        x_scr[:, pl.ds(start, rows), :] = x2.reshape(bt, rows, D)

    n_q_tiles = S // q_tile
    if n_q_tiles == 1:
        q_tile_body(0)                                # static path (small S / demo)
    else:
        def body(i, carry):
            q_tile_body(pl.multiple_of(i * q_tile, 8))
            return carry
        jax.lax.fori_loop(0, n_q_tiles, body, 0)

    @pl.when(layer == pl.num_programs(1) - 1)
    def _emit():
        out_ref[...] = x_scr[...].astype(out_ref.dtype)


# ----------------------- one-time parameter packing (hoisted) -----------------------
def prepare_encoder_params(layer_params):
    """Call ONCE at model load: stack layers, cast matmul weights to bf16, coalesce the
    12 small bias / LayerNorm vectors into two packed arrays."""
    L = len(layer_params)
    D = layer_params[0]["wq"].shape[0]
    F = layer_params[0]["w1"].shape[1]
    st = {k: jnp.stack([p[k] for p in layer_params], axis=0) for k in layer_params[0]}

    vecs_d = jnp.concatenate(
        [st[n].astype(jnp.float32) for n in
         ("bq", "bk", "bv", "bo", "ln1_w", "ln1_b", "b2", "ln2_w", "ln2_b")], axis=1)
    vecs_d = jnp.concatenate(
        [vecs_d, jnp.zeros((L, 16 - vecs_d.shape[1], D), jnp.float32)], axis=1)
    vecs_f = jnp.concatenate(
        [st["b1"].astype(jnp.float32), jnp.zeros((L, 7, F), jnp.float32)], axis=1)

    return {
        "wq": st["wq"].astype(jnp.bfloat16), "wk": st["wk"].astype(jnp.bfloat16),
        "wv": st["wv"].astype(jnp.bfloat16), "wo": st["wo"].astype(jnp.bfloat16),
        "w1": st["w1"].astype(jnp.bfloat16), "w2": st["w2"].astype(jnp.bfloat16),
        "vecs_d": vecs_d,    # rows: bq,bk,bv,bo,ln1w,ln1b,b2,ln2w,ln2b (padded to 16)
        "vecs_f": vecs_f,    # row 0: b1 (padded to 8)
        "num_layers": L,
    }


# ----------------------------------- wrapper -----------------------------------
def _largest_divisor(n, cap, align=1):
    for d in range(min(n, cap), 0, -1):
        if n % d == 0 and (d == n or d % align == 0):
            return d
    return n


def _vmem_limit_bytes():
    # ~75% of physical VMEM (≈48 MiB on v7x, ≈96 MiB on v5e/v6e); None -> compiler default.
    try:
        cap = getattr(pltpu.get_tpu_info(), "vmem_capacity_bytes", None)
        if cap:
            return int(cap) * 3 // 4
    except Exception:
        pass
    return None


def _softmax_exp_dtype():
    # bf16 exp roughly doubles EUP throughput on v6e/v7x; keep f32 on v5e and older.
    try:
        kind = jax.devices()[0].device_kind.lower()
    except Exception:
        return jnp.float32
    if any(old in kind for old in ("v2", "v3", "v4", "v5")):
        return jnp.float32
    return jnp.bfloat16


def transformer_encoder_pallas(src_sbd, pos_sbd, params, nhead, *,
                               block_batch=2, q_tile_max=128):
    """src/pos: (S, B, D) like the PyTorch module.  `params` is the packed dict from
    prepare_encoder_params (preferred) or a raw per-layer list.  Returns (S, B, D)."""
    if not isinstance(params, dict):
        params = prepare_encoder_params(params)      # fallback: per-call packing

    S, B, D = src_sbd.shape
    L = params["num_layers"]
    F = params["w1"].shape[2]
    assert D % nhead == 0, "d_model must be divisible by nhead"

    bt = _largest_divisor(B, block_batch)                 # batch tile (weight-DMA amortization)
    q_tile = _largest_divisor(S, q_tile_max, align=8)     # query tile (caps peak VMEM)
    # TODO(synk): if S has no 8-aligned divisor <= q_tile_max the kernel falls back to an
    # untiled (full-S) pass, which may exceed VMEM for very long, prime-ish sequence lengths.

    x = jnp.transpose(src_sbd, (1, 0, 2))                 # (B, S, D)
    pos = jnp.transpose(pos_sbd, (1, 0, 2))

    act_spec = pl.BlockSpec((bt, S, D), lambda b, l: (b, 0, 0))

    def wspec(shape):   # per-layer parameter block, streamed along the layer grid axis
        return pl.BlockSpec(shape, lambda b, l: (l, 0, 0))

    in_specs = [
        act_spec, act_spec,                         # x, pos
        wspec((1, D, D)), wspec((1, D, D)),         # wq, wk
        wspec((1, D, D)), wspec((1, D, D)),         # wv, wo
        wspec((1, D, F)), wspec((1, F, D)),         # w1, w2
        wspec((1, 16, D)), wspec((1, 8, F)),        # packed bias/LN vectors
    ]

    cp_kwargs = dict(dimension_semantics=("parallel", "arbitrary"))
    vmem_limit = _vmem_limit_bytes()
    if vmem_limit is not None:
        cp_kwargs["vmem_limit_bytes"] = vmem_limit

    kernel = functools.partial(encoder_kernel, nhead, bt, q_tile, _softmax_exp_dtype())

    out = pl.pallas_call(
        kernel,
        out_shape=jax.ShapeDtypeStruct((B, S, D), src_sbd.dtype),
        grid=(B // bt, L),
        in_specs=in_specs,
        out_specs=act_spec,
        scratch_shapes=[pltpu.VMEM((bt, S, D), jnp.float32)],
        compiler_params=pltpu.CompilerParams(**cp_kwargs),
    )(x, pos,
      params["wq"], params["wk"], params["wv"], params["wo"],
      params["w1"], params["w2"], params["vecs_d"], params["vecs_f"])

    return jnp.transpose(out, (1, 0, 2))


# ----------------- pure-JAX f32 reference (for validation) -----------------
def _layernorm_ref(x, w, b, eps=1e-5):
    mu = jnp.mean(x, axis=-1, keepdims=True)
    var = jnp.mean((x - mu) ** 2, axis=-1, keepdims=True)
    return (x - mu) / jnp.sqrt(var + eps) * w + b


def _layer_ref(x, pos, p, nhead):
    D = x.shape[-1]
    hd = D // nhead
    qk_in = x + pos
    q = qk_in @ p["wq"] + p["bq"]
    k = qk_in @ p["wk"] + p["bk"]
    v = x @ p["wv"] + p["bv"]

    def split(t):  # (B, S, D) -> (B, H, S, hd)
        B, S, _ = t.shape
        return jnp.transpose(t.reshape(B, S, nhead, hd), (0, 2, 1, 3))

    qh, kh, vh = split(q) / math.sqrt(hd), split(k), split(v)
    s = jnp.einsum("bhqd,bhkd->bhqk", qh, kh)
    pattn = jax.nn.softmax(s, axis=-1)
    o = jnp.einsum("bhqk,bhkd->bhqd", pattn, vh)
    B, H, S, _ = o.shape
    o = jnp.transpose(o, (0, 2, 1, 3)).reshape(B, S, D)
    o = o @ p["wo"] + p["bo"]

    x1 = _layernorm_ref(x + o, p["ln1_w"], p["ln1_b"])
    h = jnp.maximum(x1 @ p["w1"] + p["b1"], 0.0)
    h = h @ p["w2"] + p["b2"]
    return _layernorm_ref(x1 + h, p["ln2_w"], p["ln2_b"])


def transformer_encoder_ref(src_sbd, pos_sbd, layer_params, nhead):
    x = jnp.transpose(src_sbd, (1, 0, 2))
    pos = jnp.transpose(pos_sbd, (1, 0, 2))
    for p in layer_params:
        x = _layer_ref(x, pos, p, nhead)
    return jnp.transpose(x, (1, 0, 2))


# ----------------- deterministic parameter init -----------------
def init_layer_params(key, d_model, dim_ff):
    ks = jax.random.split(key, 12)
    scale = 0.05

    def w(k, shape):
        return scale * jax.random.normal(k, shape, jnp.float32)

    return {
        # projection weights stored as (in_dim, out_dim) so the kernel does x @ W
        "wq": w(ks[0], (d_model, d_model)), "bq": w(ks[1], (1, d_model)),
        "wk": w(ks[2], (d_model, d_model)), "bk": w(ks[3], (1, d_model)),
        "wv": w(ks[4], (d_model, d_model)), "bv": w(ks[5], (1, d_model)),
        "wo": w(ks[6], (d_model, d_model)), "bo": w(ks[7], (1, d_model)),
        "ln1_w": jnp.ones((1, d_model), jnp.float32),
        "ln1_b": jnp.zeros((1, d_model), jnp.float32),
        "w1": w(ks[8], (d_model, dim_ff)), "b1": w(ks[9], (1, dim_ff)),
        "w2": w(ks[10], (dim_ff, d_model)), "b2": w(ks[11], (1, d_model)),
        "ln2_w": jnp.ones((1, d_model), jnp.float32),
        "ln2_b": jnp.zeros((1, d_model), jnp.float32),
    }


if __name__ == "__main__":
    S, B, D, H, FF, L = 8, 2, 32, 4, 64, 2

    key = jax.random.PRNGKey(0)
    k_src, k_pos, k_params = jax.random.split(key, 3)
    src = jax.random.normal(k_src, (S, B, D), jnp.float32)
    pos = jax.random.normal(k_pos, (S, B, D), jnp.float32)

    layer_keys = jax.random.split(k_params, L)
    layer_params = [init_layer_params(layer_keys[i], D, FF) for i in range(L)]

    packed = prepare_encoder_params(layer_params)   # one-time packing, hoisted out of forward
    out = transformer_encoder_pallas(src, pos, packed, H)
    out = jax.block_until_ready(out)

    ref = transformer_encoder_ref(src, pos, layer_params, H)
    assert out.shape == (S, B, D)
    # bf16 MXU operands + approx reciprocal (and bf16 exp on v6e/v7x) vs f32 reference.
    assert jnp.allclose(out, ref, atol=2e-2, rtol=2e-2), "mismatch vs reference"

    print("KERNEL_OK")
</pallas_src>

<mosaic_0001>
module attributes {stable_mosaic.version = 11 : i64} {
  func.func @encoder_kernel(%arg0: i32, %arg1: i32, %arg2: memref<2x8x32xf32, #tpu.memory_space<vmem>>, %arg3: memref<2x8x32xf32, #tpu.memory_space<vmem>>, %arg4: memref<1x32x32xbf16, #tpu.memory_space<vmem>>, %arg5: memref<1x32x32xbf16, #tpu.memory_space<vmem>>, %arg6: memref<1x32x32xbf16, #tpu.memory_space<vmem>>, %arg7: memref<1x32x32xbf16, #tpu.memory_space<vmem>>, %arg8: memref<1x32x64xbf16, #tpu.memory_space<vmem>>, %arg9: memref<1x64x32xbf16, #tpu.memory_space<vmem>>, %arg10: memref<1x16x32xf32, #tpu.memory_space<vmem>>, %arg11: memref<1x8x64xf32, #tpu.memory_space<vmem>>, %arg12: memref<2x8x32xf32, #tpu.memory_space<vmem>>, %arg13: memref<2x8x32xf32, #tpu.memory_space<vmem>>) attributes {dimension_semantics = [#tpu.dimension_semantics<parallel>, #tpu.dimension_semantics<arbitrary>], iteration_bounds = array<i64: 1, 2>, scalar_prefetch = 0 : i64, scratch_operands = 1 : i64, tpu.core_type = #tpu.core_type<tc>, window_params = [{transform_indices = @transform_0, window_bounds = array<i64: 2, 8, 32>}, {transform_indices = @transform_1, window_bounds = array<i64: 2, 8, 32>}, {transform_indices = @transform_2, window_bounds = array<i64: 1, 32, 32>}, {transform_indices = @transform_3, window_bounds = array<i64: 1, 32, 32>}, {transform_indices = @transform_4, window_bounds = array<i64: 1, 32, 32>}, {transform_indices = @transform_5, window_bounds = array<i64: 1, 32, 32>}, {transform_indices = @transform_6, window_bounds = array<i64: 1, 32, 64>}, {transform_indices = @transform_7, window_bounds = array<i64: 1, 64, 32>}, {transform_indices = @transform_8, window_bounds = array<i64: 1, 16, 32>}, {transform_indices = @transform_9, window_bounds = array<i64: 1, 8, 64>}, {transform_indices = @transform_10, window_bounds = array<i64: 2, 8, 32>}]} {
    %c0_i32 = arith.constant 0 : i32
    %0 = arith.cmpi eq, %arg1, %c0_i32 : i32
    %1 = arith.extui %0 : i1 to i32
    %c0_i32_0 = arith.constant 0 : i32
    %2 = arith.cmpi ne, %1, %c0_i32_0 : i32
    scf.if %2 {
      %c0_61 = arith.constant 0 : index
      %c0_62 = arith.constant 0 : index
      %c0_63 = arith.constant 0 : index
      %147 = vector.load %arg2[%c0_61, %c0_62, %c0_63] : memref<2x8x32xf32, #tpu.memory_space<vmem>>, vector<2x8x32xf32>
      %c0_64 = arith.constant 0 : index
      %c0_65 = arith.constant 0 : index
      %c0_66 = arith.constant 0 : index
      %148 = vector.load %arg13[%c0_64, %c0_65, %c0_66] : memref<2x8x32xf32, #tpu.memory_space<vmem>>, vector<2x8x32xf32>
      tpu.vector_store %arg13[%c0_64, %c0_65, %c0_66], %147 {strides = array<i32>} : memref<2x8x32xf32, #tpu.memory_space<vmem>>, vector<2x8x32xf32>,
    } else {
    }
    %c0 = arith.constant 0 : index
    %c0_1 = arith.constant 0 : index
    %c0_2 = arith.constant 0 : index
    %3 = vector.load %arg4[%c0, %c0_1, %c0_2] : memref<1x32x32xbf16, #tpu.memory_space<vmem>>, vector<1x32x32xbf16>
    %4 = vector.shape_cast %3 : vector<1x32x32xbf16> to vector<32x32xbf16>
    %c0_3 = arith.constant 0 : index
    %c0_4 = arith.constant 0 : index
    %c0_5 = arith.constant 0 : index
    %5 = vector.load %arg5[%c0_3, %c0_4, %c0_5] : memref<1x32x32xbf16, #tpu.memory_space<vmem>>, vector<1x32x32xbf16>
    %6 = vector.shape_cast %5 : vector<1x32x32xbf16> to vector<32x32xbf16>
    %c0_6 = arith.constant 0 : index
    %c0_7 = arith.constant 0 : index
    %c0_8 = arith.constant 0 : index
    %7 = vector.load %arg6[%c0_6, %c0_7, %c0_8] : memref<1x32x32xbf16, #tpu.memory_space<vmem>>, vector<1x32x32xbf16>
    %8 = vector.shape_cast %7 : vector<1x32x32xbf16> to vector<32x32xbf16>
    %c0_9 = arith.constant 0 : index
    %c0_10 = arith.constant 0 : index
    %c0_11 = arith.constant 0 : index
    %9 = vector.load %arg7[%c0_9, %c0_10, %c0_11] : memref<1x32x32xbf16, #tpu.memory_space<vmem>>, vector<1x32x32xbf16>
    %10 = vector.shape_cast %9 : vector<1x32x32xbf16> to vector<32x32xbf16>
    %c0_12 = arith.constant 0 : index
    %c0_13 = arith.constant 0 : index
    %c0_14 = arith.constant 0 : index
    %11 = vector.load %arg8[%c0_12, %c0_13, %c0_14] : memref<1x32x64xbf16, #tpu.memory_space<vmem>>, vector<1x32x64xbf16>
    %12 = vector.shape_cast %11 : vector<1x32x64xbf16> to vector<32x64xbf16>
    %c0_15 = arith.constant 0 : index
    %c0_16 = arith.constant 0 : index
    %c0_17 = arith.constant 0 : index
    %13 = vector.load %arg9[%c0_15, %c0_16, %c0_17] : memref<1x64x32xbf16, #tpu.memory_space<vmem>>, vector<1x64x32xbf16>
    %14 = vector.shape_cast %13 : vector<1x64x32xbf16> to vector<64x32xbf16>
    %c0_18 = arith.constant 0 : index
    %c0_19 = arith.constant 0 : index
    %c0_20 = arith.constant 0 : index
    %15 = vector.load %arg10[%c0_18, %c0_19, %c0_20] : memref<1x16x32xf32, #tpu.memory_space<vmem>>, vector<1x16x32xf32>
    %16 = vector.shape_cast %15 : vector<1x16x32xf32> to vector<16x32xf32>
    %17 = vector.extract_strided_slice %16 {offsets = [0, 0], sizes = [1, 32], strides = [1, 1]} : vector<16x32xf32> to vector<1x32xf32>
    %18 = vector.extract_strided_slice %16 {offsets = [1, 0], sizes = [1, 32], strides = [1, 1]} : vector<16x32xf32> to vector<1x32xf32>
    %19 = vector.extract_strided_slice %16 {offsets = [2, 0], sizes = [1, 32], strides = [1, 1]} : vector<16x32xf32> to vector<1x32xf32>
    %20 = vector.extract_strided_slice %16 {offsets = [3, 0], sizes = [1, 32], strides = [1, 1]} : vector<16x32xf32> to vector<1x32xf32>
    %21 = vector.extract_strided_slice %16 {offsets = [4, 0], sizes = [1, 32], strides = [1, 1]} : vector<16x32xf32> to vector<1x32xf32>
    %22 = vector.extract_strided_slice %16 {offsets = [5, 0], sizes = [1, 32], strides = [1, 1]} : vector<16x32xf32> to vector<1x32xf32>
    %23 = vector.extract_strided_slice %16 {offsets = [6, 0], sizes = [1, 32], strides = [1, 1]} : vector<16x32xf32> to vector<1x32xf32>
    %24 = vector.extract_strided_slice %16 {offsets = [7, 0], sizes = [1, 32], strides = [1, 1]} : vector<16x32xf32> to vector<1x32xf32>
    %25 = vector.extract_strided_slice %16 {offsets = [8, 0], sizes = [1, 32], strides = [1, 1]} : vector<16x32xf32> to vector<1x32xf32>
    %c0_21 = arith.constant 0 : index
    %c0_22 = arith.constant 0 : index
    %c0_23 = arith.constant 0 : index
    %26 = vector.load %arg11[%c0_21, %c0_22, %c0_23] : memref<1x8x64xf32, #tpu.memory_space<vmem>>, vector<1x8x64xf32>
    %27 = vector.shape_cast %26 : vector<1x8x64xf32> to vector<8x64xf32>
    %28 = vector.extract_strided_slice %27 {offsets = [0, 0], sizes = [1, 64], strides = [1, 1]} : vector<8x64xf32> to vector<1x64xf32>
    %c0_24 = arith.constant 0 : index
    %c0_25 = arith.constant 0 : index
    %c0_26 = arith.constant 0 : index
    %29 = vector.load %arg13[%c0_24, %c0_25, %c0_26] : memref<2x8x32xf32, #tpu.memory_space<vmem>>, vector<2x8x32xf32>
    %c0_27 = arith.constant 0 : index
    %c0_28 = arith.constant 0 : index
    %c0_29 = arith.constant 0 : index
    %30 = vector.load %arg3[%c0_27, %c0_28, %c0_29] : memref<2x8x32xf32, #tpu.memory_space<vmem>>, vector<2x8x32xf32>
    %31 = arith.addf %29, %30 : vector<2x8x32xf32>
    %32 = arith.truncf %31 : vector<2x8x32xf32> to vector<2x8x32xbf16>
    %33 = vector.shape_cast %32 : vector<2x8x32xbf16> to vector<16x32xbf16>
    %34 = arith.truncf %29 : vector<2x8x32xf32> to vector<2x8x32xbf16>
    %35 = vector.shape_cast %34 : vector<2x8x32xbf16> to vector<16x32xbf16>
    %cst = arith.constant dense<0.000000e+00> : vector<16x32xf32>
    %36 = tpu.matmul %33, %6, %cst {dimension_numbers = #tpu.dot_dimension_numbers<[1], [0], [0], [1], [0, 0, 1, 1], [], []>} : vector<16x32xbf16>, vector<32x32xbf16>, vector<16x32xf32> -> vector<16x32xf32>
    %37 = vector.broadcast %18 : vector<1x32xf32> to vector<16x32xf32>
    %38 = arith.addf %36, %37 : vector<16x32xf32>
    %cst_30 = arith.constant dense<0.000000e+00> : vector<16x32xf32>
    %39 = tpu.matmul %35, %8, %cst_30 {dimension_numbers = #tpu.dot_dimension_numbers<[1], [0], [0], [1], [0, 0, 1, 1], [], []>} : vector<16x32xbf16>, vector<32x32xbf16>, vector<16x32xf32> -> vector<16x32xf32>
    %40 = vector.broadcast %19 : vector<1x32xf32> to vector<16x32xf32>
    %41 = arith.addf %39, %40 : vector<16x32xf32>
    %42 = arith.truncf %38 : vector<16x32xf32> to vector<16x32xbf16>
    %43 = vector.shape_cast %42 : vector<16x32xbf16> to vector<2x8x4x8xbf16>
    %44 = tpu.transpose %43, [0, 2, 1, 3] : vector<2x8x4x8xbf16> -> vector<2x4x8x8xbf16>
    %45 = vector.shape_cast %44 : vector<2x4x8x8xbf16> to vector<8x8x8xbf16>
    %46 = arith.truncf %41 : vector<16x32xf32> to vector<16x32xbf16>
    %47 = vector.shape_cast %46 : vector<16x32xbf16> to vector<2x8x4x8xbf16>
    %48 = tpu.transpose %47, [0, 2, 1, 3] : vector<2x8x4x8xbf16> -> vector<2x4x8x8xbf16>
    %49 = vector.shape_cast %48 : vector<2x4x8x8xbf16> to vector<8x8x8xbf16>
    %c0_31 = arith.constant 0 : index
    %c0_32 = arith.constant 0 : index
    %c0_33 = arith.constant 0 : index
    %50 = vector.load %arg13[%c0_31, %c0_32, %c0_33] : memref<2x8x32xf32, #tpu.memory_space<vmem>>, vector<2x8x32xf32>
    %c0_34 = arith.constant 0 : index
    %c0_35 = arith.constant 0 : index
    %c0_36 = arith.constant 0 : index
    %51 = vector.load %arg3[%c0_34, %c0_35, %c0_36] : memref<2x8x32xf32, #tpu.memory_space<vmem>>, vector<2x8x32xf32>
    %52 = vector.shape_cast %50 : vector<2x8x32xf32> to vector<16x32xf32>
    %53 = arith.addf %50, %51 : vector<2x8x32xf32>
    %54 = arith.truncf %53 : vector<2x8x32xf32> to vector<2x8x32xbf16>
    %55 = vector.shape_cast %54 : vector<2x8x32xbf16> to vector<16x32xbf16>
    %cst_37 = arith.constant dense<0.000000e+00> : vector<16x32xf32>
    %56 = tpu.matmul %55, %4, %cst_37 {dimension_numbers = #tpu.dot_dimension_numbers<[1], [0], [0], [1], [0, 0, 1, 1], [], []>} : vector<16x32xbf16>, vector<32x32xbf16>, vector<16x32xf32> -> vector<16x32xf32>
    %57 = vector.broadcast %17 : vector<1x32xf32> to vector<16x32xf32>
    %58 = arith.addf %56, %57 : vector<16x32xf32>
    %cst_38 = arith.constant 0.353553385 : f32
    %59 = vector.broadcast %cst_38 : f32 to vector<16x32xf32>
    %60 = arith.mulf %58, %59 : vector<16x32xf32>
    %61 = arith.truncf %60 : vector<16x32xf32> to vector<16x32xbf16>
    %62 = vector.shape_cast %61 : vector<16x32xbf16> to vector<2x8x4x8xbf16>
    %63 = tpu.transpose %62, [0, 2, 1, 3] : vector<2x8x4x8xbf16> -> vector<2x4x8x8xbf16>
    %64 = vector.shape_cast %63 : vector<2x4x8x8xbf16> to vector<8x8x8xbf16>
    "tpu.trace_start"() <{level = 10 : i32, message = "bqd,bkd->bqk"}> : () -> ()
    %cst_39 = arith.constant dense<0.000000e+00> : vector<8x8x8xf32>
    %65 = tpu.matmul %64, %45, %cst_39 {dimension_numbers = #tpu.dot_dimension_numbers<[2], [2], [1], [1], [0, 0, 0, 1, 1, 1], [0], [0]>} : vector<8x8x8xbf16>, vector<8x8x8xbf16>, vector<8x8x8xf32> -> vector<8x8x8xf32>
    "tpu.trace_stop"() : () -> ()
    %cst_40 = arith.constant dense<0xFF800000> : vector<8x8xf32>
    %66 = vector.multi_reduction <maximumf>, %65, %cst_40 [2] : vector<8x8x8xf32> to vector<8x8xf32>
    %67 = vector.shape_cast %66 : vector<8x8xf32> to vector<8x8x1xf32>
    %68 = vector.broadcast %67 : vector<8x8x1xf32> to vector<8x8x8xf32>
    %69 = arith.subf %65, %68 : vector<8x8x8xf32>
    %70 = arith.truncf %69 : vector<8x8x8xf32> to vector<8x8x8xbf16>
    %71 = math.exp %70 : vector<8x8x8xbf16>
    %72 = arith.extf %71 : vector<8x8x8xbf16> to vector<8x8x8xf32>
    %cst_41 = arith.constant dense<0.000000e+00> : vector<8x8xf32>
    %73 = vector.multi_reduction <add>, %72, %cst_41 [2] : vector<8x8x8xf32> to vector<8x8xf32>
    %74 = vector.shape_cast %73 : vector<8x8xf32> to vector<8x8x1xf32>
    "tpu.trace_start"() <{level = 10 : i32, message = "bqk,bkd->bqd"}> : () -> ()
    %cst_42 = arith.constant dense<0.000000e+00> : vector<8x8x8xf32>
    %75 = tpu.matmul %71, %49, %cst_42 {dimension_numbers = #tpu.dot_dimension_numbers<[2], [1], [1], [2], [0, 0, 0, 1, 1, 2], [0], [0]>} : vector<8x8x8xbf16>, vector<8x8x8xbf16>, vector<8x8x8xf32> -> vector<8x8x8xf32>
    "tpu.trace_stop"() : () -> ()
    %76 = tpu.reciprocal %74 {approx = true} : vector<8x8x1xf32> -> vector<8x8x1xf32>
    %77 = vector.broadcast %76 : vector<8x8x1xf32> to vector<8x8x8xf32>
    %78 = arith.mulf %75, %77 : vector<8x8x8xf32>
    %79 = vector.shape_cast %78 : vector<8x8x8xf32> to vector<2x4x8x8xf32>
    %80 = tpu.transpose %79, [0, 2, 1, 3] : vector<2x4x8x8xf32> -> vector<2x8x4x8xf32>
    %81 = vector.shape_cast %80 : vector<2x8x4x8xf32> to vector<16x32xf32>
    %82 = arith.truncf %81 : vector<16x32xf32> to vector<16x32xbf16>
    %cst_43 = arith.constant dense<0.000000e+00> : vector<16x32xf32>
    %83 = tpu.matmul %82, %10, %cst_43 {dimension_numbers = #tpu.dot_dimension_numbers<[1], [0], [0], [1], [0, 0, 1, 1], [], []>} : vector<16x32xbf16>, vector<32x32xbf16>, vector<16x32xf32> -> vector<16x32xf32>
    %84 = vector.broadcast %20 : vector<1x32xf32> to vector<16x32xf32>
    %85 = arith.addf %83, %84 : vector<16x32xf32>
    %86 = arith.addf %52, %85 : vector<16x32xf32>
    %cst_44 = arith.constant dense<0.000000e+00> : vector<16xf32>
    %87 = vector.multi_reduction <add>, %86, %cst_44 [1] : vector<16x32xf32> to vector<16xf32>
    %88 = vector.shape_cast %87 : vector<16xf32> to vector<16x1xf32>
    %cst_45 = arith.constant 3.200000e+01 : f32
    %89 = vector.broadcast %cst_45 : f32 to vector<16x1xf32>
    %90 = arith.divf %88, %89 : vector<16x1xf32>
    %91 = vector.broadcast %90 : vector<16x1xf32> to vector<16x32xf32>
    %92 = arith.subf %86, %91 : vector<16x32xf32>
    %93 = arith.mulf %92, %92 : vector<16x32xf32>
    %cst_46 = arith.constant dense<0.000000e+00> : vector<16xf32>
    %94 = vector.multi_reduction <add>, %93, %cst_46 [1] : vector<16x32xf32> to vector<16xf32>
    %95 = vector.shape_cast %94 : vector<16xf32> to vector<16x1xf32>
    %cst_47 = arith.constant 3.200000e+01 : f32
    %96 = vector.broadcast %cst_47 : f32 to vector<16x1xf32>
    %97 = arith.divf %95, %96 : vector<16x1xf32>
    %98 = vector.broadcast %90 : vector<16x1xf32> to vector<16x32xf32>
    %99 = arith.subf %86, %98 : vector<16x32xf32>
    %cst_48 = arith.constant 9.99999974E-6 : f32
    %100 = vector.broadcast %cst_48 : f32 to vector<16x1xf32>
    %101 = arith.addf %97, %100 : vector<16x1xf32>
    %102 = math.rsqrt %101 : vector<16x1xf32>
    %103 = vector.broadcast %102 : vector<16x1xf32> to vector<16x32xf32>
    %104 = arith.mulf %99, %103 : vector<16x32xf32>
    %105 = vector.broadcast %21 : vector<1x32xf32> to vector<16x32xf32>
    %106 = arith.mulf %104, %105 : vector<16x32xf32>
    %107 = vector.broadcast %22 : vector<1x32xf32> to vector<16x32xf32>
    %108 = arith.addf %106, %107 : vector<16x32xf32>
    %109 = arith.truncf %108 : vector<16x32xf32> to vector<16x32xbf16>
    %cst_49 = arith.constant dense<0.000000e+00> : vector<16x64xf32>
    %110 = tpu.matmul %109, %12, %cst_49 {dimension_numbers = #tpu.dot_dimension_numbers<[1], [0], [0], [1], [0, 0, 1, 1], [], []>} : vector<16x32xbf16>, vector<32x64xbf16>, vector<16x64xf32> -> vector<16x64xf32>
    %111 = vector.broadcast %28 : vector<1x64xf32> to vector<16x64xf32>
    %112 = arith.addf %110, %111 : vector<16x64xf32>
    %cst_50 = arith.constant 0.000000e+00 : f32
    %113 = vector.broadcast %cst_50 : f32 to vector<16x64xf32>
    %114 = arith.maximumf %112, %113 : vector<16x64xf32>
    %115 = arith.truncf %114 : vector<16x64xf32> to vector<16x64xbf16>
    %cst_51 = arith.constant dense<0.000000e+00> : vector<16x32xf32>
    %116 = tpu.matmul %115, %14, %cst_51 {dimension_numbers = #tpu.dot_dimension_numbers<[1], [0], [0], [1], [0, 0, 1, 1], [], []>} : vector<16x64xbf16>, vector<64x32xbf16>, vector<16x32xf32> -> vector<16x32xf32>
    %117 = vector.broadcast %23 : vector<1x32xf32> to vector<16x32xf32>
    %118 = arith.addf %116, %117 : vector<16x32xf32>
    %119 = arith.addf %108, %118 : vector<16x32xf32>
    %cst_52 = arith.constant dense<0.000000e+00> : vector<16xf32>
    %120 = vector.multi_reduction <add>, %119, %cst_52 [1] : vector<16x32xf32> to vector<16xf32>
    %121 = vector.shape_cast %120 : vector<16xf32> to vector<16x1xf32>
    %cst_53 = arith.constant 3.200000e+01 : f32
    %122 = vector.broadcast %cst_53 : f32 to vector<16x1xf32>
    %123 = arith.divf %121, %122 : vector<16x1xf32>
    %124 = vector.broadcast %123 : vector<16x1xf32> to vector<16x32xf32>
    %125 = arith.subf %119, %124 : vector<16x32xf32>
    %126 = arith.mulf %125, %125 : vector<16x32xf32>
    %cst_54 = arith.constant dense<0.000000e+00> : vector<16xf32>
    %127 = vector.multi_reduction <add>, %126, %cst_54 [1] : vector<16x32xf32> to vector<16xf32>
    %128 = vector.shape_cast %127 : vector<16xf32> to vector<16x1xf32>
    %cst_55 = arith.constant 3.200000e+01 : f32
    %129 = vector.broadcast %cst_55 : f32 to vector<16x1xf32>
    %130 = arith.divf %128, %129 : vector<16x1xf32>
    %131 = vector.broadcast %123 : vector<16x1xf32> to vector<16x32xf32>
    %132 = arith.subf %119, %131 : vector<16x32xf32>
    %cst_56 = arith.constant 9.99999974E-6 : f32
    %133 = vector.broadcast %cst_56 : f32 to vector<16x1xf32>
    %134 = arith.addf %130, %133 : vector<16x1xf32>
    %135 = math.rsqrt %134 : vector<16x1xf32>
    %136 = vector.broadcast %135 : vector<16x1xf32> to vector<16x32xf32>
    %137 = arith.mulf %132, %136 : vector<16x32xf32>
    %138 = vector.broadcast %24 : vector<1x32xf32> to vector<16x32xf32>
    %139 = arith.mulf %137, %138 : vector<16x32xf32>
    %140 = vector.broadcast %25 : vector<1x32xf32> to vector<16x32xf32>
    %141 = arith.addf %139, %140 : vector<16x32xf32>
    %142 = vector.shape_cast %141 : vector<16x32xf32> to vector<2x8x32xf32>
    %c0_57 = arith.constant 0 : index
    %c0_58 = arith.constant 0 : index
    %c0_59 = arith.constant 0 : index
    %143 = vector.load %arg13[%c0_57, %c0_58, %c0_59] : memref<2x8x32xf32, #tpu.memory_space<vmem>>, vector<2x8x32xf32>
    tpu.vector_store %arg13[%c0_57, %c0_58, %c0_59], %142 {strides = array<i32>} : memref<2x8x32xf32, #tpu.memory_space<vmem>>, vector<2x8x32xf32>,
    %c1_i32 = arith.constant 1 : i32
    %144 = arith.cmpi eq, %arg1, %c1_i32 : i32
    %145 = arith.extui %144 : i1 to i32
    %c0_i32_60 = arith.constant 0 : i32
    %146 = arith.cmpi ne, %145, %c0_i32_60 : i32
    scf.if %146 {
      %c0_61 = arith.constant 0 : index
      %c0_62 = arith.constant 0 : index
      %c0_63 = arith.constant 0 : index
      %147 = vector.load %arg13[%c0_61, %c0_62, %c0_63] : memref<2x8x32xf32, #tpu.memory_space<vmem>>, vector<2x8x32xf32>
      %c0_64 = arith.constant 0 : index
      %c0_65 = arith.constant 0 : index
      %c0_66 = arith.constant 0 : index
      %148 = vector.load %arg12[%c0_64, %c0_65, %c0_66] : memref<2x8x32xf32, #tpu.memory_space<vmem>>, vector<2x8x32xf32>
      tpu.vector_store %arg12[%c0_64, %c0_65, %c0_66], %147 {strides = array<i32>} : memref<2x8x32xf32, #tpu.memory_space<vmem>>, vector<2x8x32xf32>,
    } else {
    }
    return
  }
  func.func @transform_0(%arg0: i32, %arg1: i32) -> (i32, i32, i32) {
    %c0_i32 = arith.constant 0 : i32
    %c0_i32_0 = arith.constant 0 : i32
    %c0_i32_1 = arith.constant 0 : i32
    return %arg0, %c0_i32, %c0_i32_0 : i32, i32, i32
  }
  func.func @transform_1(%arg0: i32, %arg1: i32) -> (i32, i32, i32) {
    %c0_i32 = arith.constant 0 : i32
    %c0_i32_0 = arith.constant 0 : i32
    %c0_i32_1 = arith.constant 0 : i32
    return %arg0, %c0_i32, %c0_i32_0 : i32, i32, i32
  }
  func.func @transform_2(%arg0: i32, %arg1: i32) -> (i32, i32, i32) {
    %c0_i32 = arith.constant 0 : i32
    %c0_i32_0 = arith.constant 0 : i32
    %c0_i32_1 = arith.constant 0 : i32
    return %arg1, %c0_i32, %c0_i32_0 : i32, i32, i32
  }
  func.func @transform_3(%arg0: i32, %arg1: i32) -> (i32, i32, i32) {
    %c0_i32 = arith.constant 0 : i32
    %c0_i32_0 = arith.constant 0 : i32
    %c0_i32_1 = arith.constant 0 : i32
    return %arg1, %c0_i32, %c0_i32_0 : i32, i32, i32
  }
  func.func @transform_4(%arg0: i32, %arg1: i32) -> (i32, i32, i32) {
    %c0_i32 = arith.constant 0 : i32
    %c0_i32_0 = arith.constant 0 : i32
    %c0_i32_1 = arith.constant 0 : i32
    return %arg1, %c0_i32, %c0_i32_0 : i32, i32, i32
  }
  func.func @transform_5(%arg0: i32, %arg1: i32) -> (i32, i32, i32) {
    %c0_i32 = arith.constant 0 : i32
    %c0_i32_0 = arith.constant 0 : i32
    %c0_i32_1 = arith.constant 0 : i32
    return %arg1, %c0_i32, %c0_i32_0 : i32, i32, i32
  }
  func.func @transform_6(%arg0: i32, %arg1: i32) -> (i32, i32, i32) {
    %c0_i32 = arith.constant 0 : i32
    %c0_i32_0 = arith.constant 0 : i32
    %c0_i32_1 = arith.constant 0 : i32
    return %arg1, %c0_i32, %c0_i32_0 : i32, i32, i32
  }
  func.func @transform_7(%arg0: i32, %arg1: i32) -> (i32, i32, i32) {
    %c0_i32 = arith.constant 0 : i32
    %c0_i32_0 = arith.constant 0 : i32
    %c0_i32_1 = arith.constant 0 : i32
    return %arg1, %c0_i32, %c0_i32_0 : i32, i32, i32
  }
  func.func @transform_8(%arg0: i32, %arg1: i32) -> (i32, i32, i32) {
    %c0_i32 = arith.constant 0 : i32
    %c0_i32_0 = arith.constant 0 : i32
    %c0_i32_1 = arith.constant 0 : i32
    return %arg1, %c0_i32, %c0_i32_0 : i32, i32, i32
  }
  func.func @transform_9(%arg0: i32, %arg1: i32) -> (i32, i32, i32) {
    %c0_i32 = arith.constant 0 : i32
    %c0_i32_0 = arith.constant 0 : i32
    %c0_i32_1 = arith.constant 0 : i32
    return %arg1, %c0_i32, %c0_i32_0 : i32, i32, i32
  }
  func.func @transform_10(%arg0: i32, %arg1: i32) -> (i32, i32, i32) {
    %c0_i32 = arith.constant 0 : i32
    %c0_i32_0 = arith.constant 0 : i32
    %c0_i32_1 = arith.constant 0 : i32
    return %arg0, %c0_i32, %c0_i32_0 : i32, i32, i32
  }
}

</mosaic_0001>

<llo_original>
// kernel: tpu_custom_call.1
$region0: #{tpu_custom_call.1}
  #allocation0 [shape = 'u32[]', space=smem, size = 0x4, offset = 0x4, fixed_abs, tag = 'smem constant byte address 0x4 - core index']
  #allocation1 [shape = 'u32[72,128]{1,0:T(1,128)}', space=vmem, size = 0x9000, scoped, tag = 'internal scratch']
  #allocation2 [shape = 'f32[2,8,32]{2,1,0:T(8,128)}', space=vmem, size = 0x2000, scoped, tag = 'scratch operand']
  %s0 = inlined_call_operand.hbm [shape: f32[2,8,32], index: 0, kind: input, shape index: {}]
  %s1 = inlined_call_operand.hbm [shape: f32[2,8,32], index: 1, kind: input, shape index: {}]
  %s2 = inlined_call_operand.vmem [shape: bf16[2,32,32], index: 2, kind: input, shape index: {}]
  %s3 = inlined_call_operand.vmem [shape: bf16[2,32,32], index: 3, kind: input, shape index: {}]
  %s4 = inlined_call_operand.vmem [shape: bf16[2,32,32], index: 4, kind: input, shape index: {}]
  %s5 = inlined_call_operand.hbm [shape: bf16[2,32,32], index: 5, kind: input, shape index: {}]
  %s6 = inlined_call_operand.hbm [shape: bf16[2,32,64], index: 6, kind: input, shape index: {}]
  %s7 = inlined_call_operand.vmem [shape: bf16[2,64,32], index: 7, kind: input, shape index: {}]
  %s8 = inlined_call_operand.hbm [shape: f32[2,16,32], index: 8, kind: input, shape index: {}]
  %s9 = inlined_call_operand.hbm [shape: f32[2,8,64], index: 9, kind: input, shape index: {}]
  %s10 = inlined_call_operand.hbm [shape: f32[2,8,32], index: 10, kind: output, shape index: {}]
  %s11 = sld [smem:[#allocation0]]
  $region105: #{tpu_custom_call.1} parent=0
    _
  %s13 = ssub.s32 1, %s11
  %s14 = scalar_select 0, %s13, %s11
  $region1: #{tpu_custom_call.1} parent=0
    #allocation3 [shape = 'u8[8192]{0}', space=vmem, size = 0x2000, scoped, tag = 'input window, operand 0, single buffered']
    #allocation4 [shape = 's32[2]{0}', space=sflag, size = 0x8, scoped, tag = 'scoped memory for tpu_custom_call.1']
    #allocation5 [shape = 's32[2]{0}', space=sflag, size = 0x8, scoped, tag = 'scoped memory for tpu_custom_call.1']
    #allocation6 [shape = 'u8[8192]{0}', space=vmem, size = 0x2000, scoped, tag = 'input window, operand 1, single buffered']
    #allocation7 [shape = 's32[1]{0}', space=sflag, size = 0x4, scoped, tag = 'scoped memory for tpu_custom_call.1']
    #allocation8 [shape = 'u8[16384]{0}', space=vmem, size = 0x4000, scoped, tag = 'input window, operand 5']
    #allocation9 [shape = 'u8[16384]{0}', space=vmem, size = 0x4000, scoped, tag = 'input window, operand 6']
    #allocation10 [shape = 'u8[16384]{0}', space=vmem, size = 0x4000, scoped, tag = 'input window, operand 8']
    #allocation11 [shape = 'u8[8192]{0}', space=vmem, size = 0x2000, scoped, tag = 'input window, operand 9']
    #allocation12 [shape = 'u8[8192]{0}', space=vmem, size = 0x2000, scoped, tag = 'output window, operand 0, single buffered']
    %15 = vsyncpa [#allocation4], 0
    %16 = vsyncpa [#allocation7], 0
    %17 = vsyncpa [#allocation5], 0
    loop: start=0, step=1, limit=4
    $region2: #{tpu_custom_call.1} parent=1 // loop_pre_header
      _
    $region3: #{tpu_custom_call.1} parent=1 // loop_header
      %s19 = sphi 0, %s23
      %p20 = scmp.ge.s32.totalorder %s19, 4
      %s26 = sphi 0, %s38
      %s27 = sphi 0, %s34
      %s28 = sphi 0, %s26
      %s29 = sphi 0, %s27
      %s30 = sphi 0, %s28
      %s31 = sphi 0, %s29
      %s41 = sphi 0, %s43
      %s44 = sphi 0, %s41
      %s45 = sphi 0, %s44
      %s61 = sphi 0, %s45
      %s67 = sphi 0, %s69
      %s70 = sphi 0, %s67
      %s71 = sphi 0, %s70
      %s87 = sphi 0, %s71
      %s93 = sphi 0, %s95
      %s96 = sphi 0, %s93
      %s97 = sphi 0, %s96
      %s113 = sphi 0, %s97
      %s119 = sphi 0, %s121
      %s122 = sphi 0, %s119
      %s123 = sphi 0, %s122
      %s139 = sphi 0, %s123
      %s145 = sphi 0, %s147
      %s148 = sphi 0, %s145
      %s149 = sphi 0, %s148
      %s165 = sphi 0, %s149
      %s171 = sphi 0, %s173
      %s174 = sphi 0, %s171
      %s175 = sphi 0, %s174
      %s191 = sphi 0, %s175
      %s197 = sphi 0, %s199
      %s200 = sphi 0, %s197
      %s201 = sphi 0, %s200
      %s217 = sphi 0, %s201
      %s223 = sphi 0, %s225
      %s226 = sphi 0, %s223
      %s227 = sphi 0, %s226
      %s243 = sphi 0, %s227
      %s249 = sphi 0, %s251
      %s252 = sphi 0, %s249
      %s253 = sphi 0, %s252
      %s269 = sphi 0, %s253
      %s275 = sphi 0, %s277
      %s278 = sphi 0, %s275
      %s279 = sphi 0, %s278
      %s295 = sphi 0, %s279
      %s301 = sphi 0, %s303
      %s304 = sphi 0, %s301
      %s305 = sphi 0, %s304
      %s321 = sphi 0, %s305
    $region4: #{tpu_custom_call.1} parent=1 // loop_header_branch
      %22 = sbr.rel (%p20) target = $region8
    $region5: #{tpu_custom_call.1} parent=1 // loop_body
      %s24 = ssub.s32 %s19, 1
      %s25 = ssub.s32 %s19, 2
      %s32 = sadd.s32 1, %s27
      %p33 = scmp.ge.s32.totalorder %s32, 2
      %s34 = scalar_select %p33, 0, %s32
      %s35 = sadd.s32 1, %s26
      %s36 = scalar_select %p33, %s35, %s26
      %p37 = scmp.ge.s32.totalorder %s36, 1
      %s38 = scalar_select %p37, 0, %s36
      %s39 = ssub.s32 %s26, %s38
      %p40 = scmp.eq.s32.totalorder %s39, 0
      %s42 = sadd.s32 %s41, 1
      %s43 = scalar_select %p40, %s41, %s42
      %p46 = pneg %p40
      %p47 = scmp.eq.s32.totalorder %s19, 1
      %p48 = por %p46, %p47
      %p49 = scmp.ne.s32.totalorder %s41, %s44
      %p50 = scmp.eq.s32.totalorder %s19, 0
      %p51 = por %p49, %p50
      %p52 = scmp.ne.s32.totalorder %s41, %s44
      %p53 = scmp.eq.s32.totalorder %s24, 1
      %p54 = por %p52, %p53
      %p55 = scmp.ne.s32.totalorder %s44, %s45
      %p56 = scmp.eq.s32.totalorder %s24, 0
      %p57 = por %p55, %p56
      %p58 = scmp.ne.s32.totalorder %s44, %s45
      %p59 = scmp.eq.s32.totalorder %s25, 1
      %p60 = por %p58, %p59
      %p62 = scmp.ne.s32.totalorder %s45, %s61
      %p63 = scmp.eq.s32.totalorder %s25, 0
      %p64 = por %p62, %p63
      %s65 = ssub.s32 %s26, %s38
      %p66 = scmp.eq.s32.totalorder %s65, 0
      %s68 = sadd.s32 %s67, 1
      %s69 = scalar_select %p66, %s67, %s68
      %p72 = pneg %p66
      %p73 = scmp.eq.s32.totalorder %s19, 1
      %p74 = por %p72, %p73
      %p75 = scmp.ne.s32.totalorder %s67, %s70
      %p76 = scmp.eq.s32.totalorder %s19, 0
      %p77 = por %p75, %p76
      %p78 = scmp.ne.s32.totalorder %s67, %s70
      %p79 = scmp.eq.s32.totalorder %s24, 1
      %p80 = por %p78, %p79
      %p81 = scmp.ne.s32.totalorder %s70, %s71
      %p82 = scmp.eq.s32.totalorder %s24, 0
      %p83 = por %p81, %p82
      %p84 = scmp.ne.s32.totalorder %s70, %s71
      %p85 = scmp.eq.s32.totalorder %s25, 1
      %p86 = por %p84, %p85
      %p88 = scmp.ne.s32.totalorder %s71, %s87
      %p89 = scmp.eq.s32.totalorder %s25, 0
      %p90 = por %p88, %p89
      %s91 = ssub.s32 %s27, %s34
      %p92 = scmp.eq.s32.totalorder %s91, 0
      %s94 = sadd.s32 %s93, 1
      %s95 = scalar_select %p92, %s93, %s94
      %p98 = pneg %p92
      %p99 = scmp.eq.s32.totalorder %s19, 1
      %p100 = por %p98, %p99
      %p101 = scmp.ne.s32.totalorder %s93, %s96
      %p102 = scmp.eq.s32.totalorder %s19, 0
      %p103 = por %p101, %p102
      %p104 = scmp.ne.s32.totalorder %s93, %s96
      %p105 = scmp.eq.s32.totalorder %s24, 1
      %p106 = por %p104, %p105
      %p107 = scmp.ne.s32.totalorder %s96, %s97
      %p108 = scmp.eq.s32.totalorder %s24, 0
      %p109 = por %p107, %p108
      %p110 = scmp.ne.s32.totalorder %s96, %s97
      %p111 = scmp.eq.s32.totalorder %s25, 1
      %p112 = por %p110, %p111
      %p114 = scmp.ne.s32.totalorder %s97, %s113
      %p115 = scmp.eq.s32.totalorder %s25, 0
      %p116 = por %p114, %p115
      %s117 = ssub.s32 %s27, %s34
      %p118 = scmp.eq.s32.totalorder %s117, 0
      %s120 = sadd.s32 %s119, 1
      %s121 = scalar_select %p118, %s119, %s120
      %p124 = pneg %p118
      %p125 = scmp.eq.s32.totalorder %s19, 1
      %p126 = por %p124, %p125
      %p127 = scmp.ne.s32.totalorder %s119, %s122
      %p128 = scmp.eq.s32.totalorder %s19, 0
      %p129 = por %p127, %p128
      %p130 = scmp.ne.s32.totalorder %s119, %s122
      %p131 = scmp.eq.s32.totalorder %s24, 1
      %p132 = por %p130, %p131
      %p133 = scmp.ne.s32.totalorder %s122, %s123
      %p134 = scmp.eq.s32.totalorder %s24, 0
      %p135 = por %p133, %p134
      %p136 = scmp.ne.s32.totalorder %s122, %s123
      %p137 = scmp.eq.s32.totalorder %s25, 1
      %p138 = por %p136, %p137
      %p140 = scmp.ne.s32.totalorder %s123, %s139
      %p141 = scmp.eq.s32.totalorder %s25, 0
      %p142 = por %p140, %p141
      %s143 = ssub.s32 %s27, %s34
      %p144 = scmp.eq.s32.totalorder %s143, 0
      %s146 = sadd.s32 %s145, 1
      %s147 = scalar_select %p144, %s145, %s146
      %p150 = pneg %p144
      %p151 = scmp.eq.s32.totalorder %s19, 1
      %p152 = por %p150, %p151
      %p153 = scmp.ne.s32.totalorder %s145, %s148
      %p154 = scmp.eq.s32.totalorder %s19, 0
      %p155 = por %p153, %p154
      %p156 = scmp.ne.s32.totalorder %s145, %s148
      %p157 = scmp.eq.s32.totalorder %s24, 1
      %p158 = por %p156, %p157
      %p159 = scmp.ne.s32.totalorder %s148, %s149
      %p160 = scmp.eq.s32.totalorder %s24, 0
      %p161 = por %p159, %p160
      %p162 = scmp.ne.s32.totalorder %s148, %s149
      %p163 = scmp.eq.s32.totalorder %s25, 1
      %p164 = por %p162, %p163
      %p166 = scmp.ne.s32.totalorder %s149, %s165
      %p167 = scmp.eq.s32.totalorder %s25, 0
      %p168 = por %p166, %p167
      %s169 = ssub.s32 %s27, %s34
      %p170 = scmp.eq.s32.totalorder %s169, 0
      %s172 = sadd.s32 %s171, 1
      %s173 = scalar_select %p170, %s171, %s172
      %p176 = pneg %p170
      %p177 = scmp.eq.s32.totalorder %s19, 1
      %p178 = por %p176, %p177
      %p179 = scmp.ne.s32.totalorder %s171, %s174
      %p180 = scmp.eq.s32.totalorder %s19, 0
      %p181 = por %p179, %p180
      %p182 = scmp.ne.s32.totalorder %s171, %s174
      %p183 = scmp.eq.s32.totalorder %s24, 1
      %p184 = por %p182, %p183
      %p185 = scmp.ne.s32.totalorder %s174, %s175
      %p186 = scmp.eq.s32.totalorder %s24, 0
      %p187 = por %p185, %p186
      %p188 = scmp.ne.s32.totalorder %s174, %s175
      %p189 = scmp.eq.s32.totalorder %s25, 1
      %p190 = por %p188, %p189
      %p192 = scmp.ne.s32.totalorder %s175, %s191
      %p193 = scmp.eq.s32.totalorder %s25, 0
      %p194 = por %p192, %p193
      %s195 = ssub.s32 %s27, %s34
      %p196 = scmp.eq.s32.totalorder %s195, 0
      %s198 = sadd.s32 %s197, 1
      %s199 = scalar_select %p196, %s197, %s198
      %p202 = pneg %p196
      %p203 = scmp.eq.s32.totalorder %s19, 1
      %p204 = por %p202, %p203
      %p205 = scmp.ne.s32.totalorder %s197, %s200
      %p206 = scmp.eq.s32.totalorder %s19, 0
      %p207 = por %p205, %p206
      %p208 = scmp.ne.s32.totalorder %s197, %s200
      %p209 = scmp.eq.s32.totalorder %s24, 1
      %p210 = por %p208, %p209
      %p211 = scmp.ne.s32.totalorder %s200, %s201
      %p212 = scmp.eq.s32.totalorder %s24, 0
      %p213 = por %p211, %p212
      %p214 = scmp.ne.s32.totalorder %s200, %s201
      %p215 = scmp.eq.s32.totalorder %s25, 1
      %p216 = por %p214, %p215
      %p218 = scmp.ne.s32.totalorder %s201, %s217
      %p219 = scmp.eq.s32.totalorder %s25, 0
      %p220 = por %p218, %p219
      %s221 = ssub.s32 %s27, %s34
      %p222 = scmp.eq.s32.totalorder %s221, 0
      %s224 = sadd.s32 %s223, 1
      %s225 = scalar_select %p222, %s223, %s224
      %p228 = pneg %p222
      %p229 = scmp.eq.s32.totalorder %s19, 1
      %p230 = por %p228, %p229
      %p231 = scmp.ne.s32.totalorder %s223, %s226
      %p232 = scmp.eq.s32.totalorder %s19, 0
      %p233 = por %p231, %p232
      %p234 = scmp.ne.s32.totalorder %s223, %s226
      %p235 = scmp.eq.s32.totalorder %s24, 1
      %p236 = por %p234, %p235
      %p237 = scmp.ne.s32.totalorder %s226, %s227
      %p238 = scmp.eq.s32.totalorder %s24, 0
      %p239 = por %p237, %p238
      %p240 = scmp.ne.s32.totalorder %s226, %s227
      %p241 = scmp.eq.s32.totalorder %s25, 1
      %p242 = por %p240, %p241
      %p244 = scmp.ne.s32.totalorder %s227, %s243
      %p245 = scmp.eq.s32.totalorder %s25, 0
      %p246 = por %p244, %p245
      %s247 = ssub.s32 %s27, %s34
      %p248 = scmp.eq.s32.totalorder %s247, 0
      %s250 = sadd.s32 %s249, 1
      %s251 = scalar_select %p248, %s249, %s250
      %p254 = pneg %p248
      %p255 = scmp.eq.s32.totalorder %s19, 1
      %p256 = por %p254, %p255
      %p257 = scmp.ne.s32.totalorder %s249, %s252
      %p258 = scmp.eq.s32.totalorder %s19, 0
      %p259 = por %p257, %p258
      %p260 = scmp.ne.s32.totalorder %s249, %s252
      %p261 = scmp.eq.s32.totalorder %s24, 1
      %p262 = por %p260, %p261
      %p263 = scmp.ne.s32.totalorder %s252, %s253
      %p264 = scmp.eq.s32.totalorder %s24, 0
      %p265 = por %p263, %p264
      %p266 = scmp.ne.s32.totalorder %s252, %s253
      %p267 = scmp.eq.s32.totalorder %s25, 1
      %p268 = por %p266, %p267
      %p270 = scmp.ne.s32.totalorder %s253, %s269
      %p271 = scmp.eq.s32.totalorder %s25, 0
      %p272 = por %p270, %p271
      %s273 = ssub.s32 %s27, %s34
      %p274 = scmp.eq.s32.totalorder %s273, 0
      %s276 = sadd.s32 %s275, 1
      %s277 = scalar_select %p274, %s275, %s276
      %p280 = pneg %p274
      %p281 = scmp.eq.s32.totalorder %s19, 1
      %p282 = por %p280, %p281
      %p283 = scmp.ne.s32.totalorder %s275, %s278
      %p284 = scmp.eq.s32.totalorder %s19, 0
      %p285 = por %p283, %p284
      %p286 = scmp.ne.s32.totalorder %s275, %s278
      %p287 = scmp.eq.s32.totalorder %s24, 1
      %p288 = por %p286, %p287
      %p289 = scmp.ne.s32.totalorder %s278, %s279
      %p290 = scmp.eq.s32.totalorder %s24, 0
      %p291 = por %p289, %p290
      %p292 = scmp.ne.s32.totalorder %s278, %s279
      %p293 = scmp.eq.s32.totalorder %s25, 1
      %p294 = por %p292, %p293
      %p296 = scmp.ne.s32.totalorder %s279, %s295
      %p297 = scmp.eq.s32.totalorder %s25, 0
      %p298 = por %p296, %p297
      %s299 = ssub.s32 %s26, %s38
      %p300 = scmp.eq.s32.totalorder %s299, 0
      %s302 = sadd.s32 %s301, 1
      %s303 = scalar_select %p300, %s301, %s302
      %p306 = pneg %p300
      %p307 = scmp.eq.s32.totalorder %s19, 1
      %p308 = por %p306, %p307
      %p309 = scmp.ne.s32.totalorder %s301, %s304
      %p310 = scmp.eq.s32.totalorder %s19, 0
      %p311 = por %p309, %p310
      %p312 = scmp.ne.s32.totalorder %s301, %s304
      %p313 = scmp.eq.s32.totalorder %s24, 1
      %p314 = por %p312, %p313
      %p315 = scmp.ne.s32.totalorder %s304, %s305
      %p316 = scmp.eq.s32.totalorder %s24, 0
      %p317 = por %p315, %p316
      %p318 = scmp.ne.s32.totalorder %s304, %s305
      %p319 = scmp.eq.s32.totalorder %s25, 1
      %p320 = por %p318, %p319
      %p322 = scmp.ne.s32.totalorder %s305, %s321
      %p323 = scmp.eq.s32.totalorder %s25, 0
      %p324 = por %p322, %p323
      %p325 = scmp.le.s32.totalorder 1, %s19
      %p326 = scmp.lt.s32.totalorder %s19, 3
      %p327 = pnand %p325, %p326
      %p328 = pneg %p327
      // Predicated region
      $region9: #{tpu_custom_call.1} parent=5 // pred_check
        _
      $region10: #{tpu_custom_call.1} parent=5 // pred_check_branch
        %330 = sbr.rel (%p327) target = $region12
      $region11: #{tpu_custom_call.1} parent=5 // pred_region
        %s331 = ssub.s32 %s19, 1
        // Predicated region
        $region13: #{tpu_custom_call.1} parent=11 // pred_check
          %p332 = pneg %p57
        $region14: #{tpu_custom_call.1} parent=11 // pred_check_branch
          %334 = sbr.rel (%p332) target = $region16
        $region15: #{tpu_custom_call.1} parent=11 // pred_region
          %s335 = smul.u32 2, %s28
          %337 = vsyncadd [#allocation4], 0
          %s338 = smul.addr %s335, 8
          %s339 = scalar_lea.hbm %s0, %s338
          %s340 = sshll.u32 %s339, 4
          %s341 = int_to_ptr.hbm [resolvable:$true] %s340
          %s342 = sshll.u32 [#allocation3], 4
          %s343 = int_to_ptr.vmem [resolvable:$true] %s342
          %348 = dma.hbm_to_vmem [thread:$0]  %s341, 256, %s343, [#allocation4], 128, 128, 8
        $region16: #{tpu_custom_call.1} parent=11 // pred_fallthru
          _
        // Predicated region
        $region17: #{tpu_custom_call.1} parent=11 // pred_check
          %p349 = pneg %p83
        $region18: #{tpu_custom_call.1} parent=11 // pred_check_branch
          %351 = sbr.rel (%p349) target = $region20
        $region19: #{tpu_custom_call.1} parent=11 // pred_region
          %s352 = smul.u32 2, %s28
          %354 = vsyncadd [#allocation7], 0
          %s355 = smul.addr %s352, 8
          %s356 = scalar_lea.hbm %s1, %s355
          %s357 = sshll.u32 %s356, 4
          %s358 = int_to_ptr.hbm [resolvable:$true] %s357
          %s359 = sshll.u32 [#allocation6], 4
          %s360 = int_to_ptr.vmem [resolvable:$true] %s359
          %365 = dma.hbm_to_vmem [thread:$0]  %s358, 256, %s360, [#allocation7], 128, 128, 8
        $region20: #{tpu_custom_call.1} parent=11 // pred_fallthru
          _
      $region12: #{tpu_custom_call.1} parent=5 // pred_fallthru
        _
      %p366 = scmp.lt.s32.totalorder %s19, 2
      // Predicated region
      $region21: #{tpu_custom_call.1} parent=5 // pred_check
        %p367 = pneg %p366
      $region22: #{tpu_custom_call.1} parent=5 // pred_check_branch
        %369 = sbr.rel (%p367) target = $region24
      $region23: #{tpu_custom_call.1} parent=5 // pred_region
        // Predicated region
        $region25: #{tpu_custom_call.1} parent=23 // pred_check
          %p370 = pneg %p103
        $region26: #{tpu_custom_call.1} parent=23 // pred_check_branch
          %372 = sbr.rel (%p370) target = $region28
        $region27: #{tpu_custom_call.1} parent=23 // pred_region
          %p373 = scmp.lt.s32.totalorder %s27, 1
          %s374 = scalar_select %p373, %s27, 1
          %s375 = smul.addr %s374, 4
          %s376 = smul.addr %s375, 4
          %s377 = scalar_lea.vmem %s2, %s376
        $region28: #{tpu_custom_call.1} parent=23 // pred_fallthru
          _
        // Predicated region
        $region29: #{tpu_custom_call.1} parent=23 // pred_check
          %p378 = pneg %p129
        $region30: #{tpu_custom_call.1} parent=23 // pred_check_branch
          %380 = sbr.rel (%p378) target = $region32
        $region31: #{tpu_custom_call.1} parent=23 // pred_region
          %p381 = scmp.lt.s32.totalorder %s27, 1
          %s382 = scalar_select %p381, %s27, 1
          %s383 = smul.addr %s382, 4
          %s384 = smul.addr %s383, 4
          %s385 = scalar_lea.vmem %s3, %s384
        $region32: #{tpu_custom_call.1} parent=23 // pred_fallthru
          _
        // Predicated region
        $region33: #{tpu_custom_call.1} parent=23 // pred_check
          %p386 = pneg %p155
        $region34: #{tpu_custom_call.1} parent=23 // pred_check_branch
          %388 = sbr.rel (%p386) target = $region36
        $region35: #{tpu_custom_call.1} parent=23 // pred_region
          %p389 = scmp.lt.s32.totalorder %s27, 1
          %s390 = scalar_select %p389, %s27, 1
          %s391 = smul.addr %s390, 4
          %s392 = smul.addr %s391, 4
          %s393 = scalar_lea.vmem %s4, %s392
        $region36: #{tpu_custom_call.1} parent=23 // pred_fallthru
          _
        // Predicated region
        $region37: #{tpu_custom_call.1} parent=23 // pred_check
          %p394 = pneg %p181
        $region38: #{tpu_custom_call.1} parent=23 // pred_check_branch
          %396 = sbr.rel (%p394) target = $region40
        $region39: #{tpu_custom_call.1} parent=23 // pred_region
          %s397 = sand.u32 %s19, 1
          %s398 = scalar_lea.sflag [#allocation4], %s397
          %s399 = sand.u32 %s171, 1
          %s400 = smul.addr %s399, 16
          %s401 = scalar_lea.vmem [#allocation8], %s400
          %403 = vsyncadd %s398, 0
          %s404 = smul.addr %s27, 4
          %s405 = smul.addr %s404, 4
          %s406 = scalar_lea.hbm %s5, %s405
          %s407 = sshll.u32 %s406, 4
          %s408 = int_to_ptr.hbm [resolvable:$true] %s407
          %s409 = sshll.u32 %s401, 4
          %s410 = int_to_ptr.vmem [resolvable:$true] %s409
          %415 = dma.hbm_to_vmem [thread:$0]  %s408, 256, %s410, %s398, 64, 64, 4
        $region40: #{tpu_custom_call.1} parent=23 // pred_fallthru
          _
        // Predicated region
        $region41: #{tpu_custom_call.1} parent=23 // pred_check
          %p416 = pneg %p207
        $region42: #{tpu_custom_call.1} parent=23 // pred_check_branch
          %418 = sbr.rel (%p416) target = $region44
        $region43: #{tpu_custom_call.1} parent=23 // pred_region
          %s419 = sand.u32 %s19, 1
          %s420 = scalar_lea.sflag [#allocation4], %s419
          %s421 = sand.u32 %s197, 1
          %s422 = smul.addr %s421, 16
          %s423 = scalar_lea.vmem [#allocation9], %s422
          %425 = vsyncadd %s420, 0
          %s426 = smul.addr %s27, 4
          %s427 = smul.addr %s426, 4
          %s428 = scalar_lea.hbm %s6, %s427
          %s429 = sshll.u32 %s428, 4
          %s430 = int_to_ptr.hbm [resolvable:$true] %s429
          %s431 = sshll.u32 %s423, 4
          %s432 = int_to_ptr.vmem [resolvable:$true] %s431
          %437 = dma.hbm_to_vmem [thread:$0]  %s430, 256, %s432, %s420, 64, 64, 4
        $region44: #{tpu_custom_call.1} parent=23 // pred_fallthru
          _
        // Predicated region
        $region45: #{tpu_custom_call.1} parent=23 // pred_check
          %p438 = pneg %p233
        $region46: #{tpu_custom_call.1} parent=23 // pred_check_branch
          %440 = sbr.rel (%p438) target = $region48
        $region47: #{tpu_custom_call.1} parent=23 // pred_region
          %p441 = scmp.lt.s32.totalorder %s27, 1
          %s442 = scalar_select %p441, %s27, 1
          %s443 = smul.addr %s442, 8
          %s444 = smul.addr %s443, 4
          %s445 = scalar_lea.vmem %s7, %s444
        $region48: #{tpu_custom_call.1} parent=23 // pred_fallthru
          _
        // Predicated region
        $region49: #{tpu_custom_call.1} parent=23 // pred_check
          %p446 = pneg %p259
        $region50: #{tpu_custom_call.1} parent=23 // pred_check_branch
          %448 = sbr.rel (%p446) target = $region52
        $region51: #{tpu_custom_call.1} parent=23 // pred_region
          %s449 = sand.u32 %s19, 1
          %s450 = scalar_lea.sflag [#allocation4], %s449
          %s451 = sand.u32 %s249, 1
          %s452 = smul.addr %s451, 16
          %s453 = scalar_lea.vmem [#allocation10], %s452
          %455 = vsyncadd %s450, 0
          %s456 = smul.addr %s27, 2
          %s457 = smul.addr %s456, 8
          %s458 = scalar_lea.hbm %s8, %s457
          %s459 = sshll.u32 %s458, 4
          %s460 = int_to_ptr.hbm [resolvable:$true] %s459
          %s461 = sshll.u32 %s453, 4
          %s462 = int_to_ptr.vmem [resolvable:$true] %s461
          %467 = dma.hbm_to_vmem [thread:$0]  %s460, 256, %s462, %s450, 128, 128, 8
        $region52: #{tpu_custom_call.1} parent=23 // pred_fallthru
          _
        // Predicated region
        $region53: #{tpu_custom_call.1} parent=23 // pred_check
          %p468 = pneg %p285
        $region54: #{tpu_custom_call.1} parent=23 // pred_check_branch
          %470 = sbr.rel (%p468) target = $region56
        $region55: #{tpu_custom_call.1} parent=23 // pred_region
          %s471 = sand.u32 %s19, 1
          %s472 = scalar_lea.sflag [#allocation4], %s471
          %s473 = sand.u32 %s275, 1
          %s474 = smul.addr %s473, 8
          %s475 = scalar_lea.vmem [#allocation11], %s474
          %477 = vsyncadd %s472, 0
          %s478 = smul.addr %s27, 8
          %s479 = scalar_lea.hbm %s9, %s478
          %s481 = sshll.u32 %s479, 4
          %s482 = int_to_ptr.hbm [resolvable:$true] %s481
          %s483 = sshll.u32 %s475, 4
          %s484 = int_to_ptr.vmem [resolvable:$true] %s483
          %486 = dma.hbm_to_vmem [thread:$0]  %s482, 128, %s484, %s472
        $region56: #{tpu_custom_call.1} parent=23 // pred_fallthru
          _
      $region24: #{tpu_custom_call.1} parent=5 // pred_fallthru
        _
      %p487 = scmp.le.s32.totalorder 1, %s19
      %p488 = scmp.lt.s32.totalorder %s19, 3
      %p489 = pnand %p487, %p488
      %p490 = pneg %p489
      // Predicated region
      $region57: #{tpu_custom_call.1} parent=5 // pred_check
        _
      $region58: #{tpu_custom_call.1} parent=5 // pred_check_branch
        %492 = sbr.rel (%p489) target = $region60
      $region59: #{tpu_custom_call.1} parent=5 // pred_region
        %s493 = ssub.s32 %s19, 1
        // Predicated region
        $region61: #{tpu_custom_call.1} parent=59 // pred_check
          %p494 = pneg %p57
        $region62: #{tpu_custom_call.1} parent=59 // pred_check_branch
          %496 = sbr.rel (%p494) target = $region64
        $region63: #{tpu_custom_call.1} parent=59 // pred_region
          %498 = dma.done [#allocation4], 256
        $region64: #{tpu_custom_call.1} parent=59 // pred_fallthru
          _
        // Predicated region
        $region65: #{tpu_custom_call.1} parent=59 // pred_check
          %p499 = pneg %p83
        $region66: #{tpu_custom_call.1} parent=59 // pred_check_branch
          %501 = sbr.rel (%p499) target = $region68
        $region67: #{tpu_custom_call.1} parent=59 // pred_region
          %503 = dma.done [#allocation7], 256
        $region68: #{tpu_custom_call.1} parent=59 // pred_fallthru
          _
        %s504 = sand.u32 %s24, 1
        %s505 = scalar_lea.sflag [#allocation4], %s504
        %s506 = sand.u32 %s174, 1
        %s507 = smul.addr %s506, 16
        %s508 = scalar_lea.vmem [#allocation8], %s507
        // Predicated region
        $region69: #{tpu_custom_call.1} parent=59 // pred_check
          %p509 = pneg %p187
        $region70: #{tpu_custom_call.1} parent=59 // pred_check_branch
          %511 = sbr.rel (%p509) target = $region72
        $region71: #{tpu_custom_call.1} parent=59 // pred_region
          %513 = dma.done %s505, 256
        $region72: #{tpu_custom_call.1} parent=59 // pred_fallthru
          _
        %s514 = sand.u32 %s24, 1
        %s515 = scalar_lea.sflag [#allocation4], %s514
        %s516 = sand.u32 %s200, 1
        %s517 = smul.addr %s516, 16
        %s518 = scalar_lea.vmem [#allocation9], %s517
        // Predicated region
        $region73: #{tpu_custom_call.1} parent=59 // pred_check
          %p519 = pneg %p213
        $region74: #{tpu_custom_call.1} parent=59 // pred_check_branch
          %521 = sbr.rel (%p519) target = $region76
        $region75: #{tpu_custom_call.1} parent=59 // pred_region
          %523 = dma.done %s515, 256
        $region76: #{tpu_custom_call.1} parent=59 // pred_fallthru
          _
        %s524 = sand.u32 %s24, 1
        %s525 = scalar_lea.sflag [#allocation4], %s524
        %s526 = sand.u32 %s252, 1
        %s527 = smul.addr %s526, 16
        %s528 = scalar_lea.vmem [#allocation10], %s527
        // Predicated region
        $region77: #{tpu_custom_call.1} parent=59 // pred_check
          %p529 = pneg %p265
        $region78: #{tpu_custom_call.1} parent=59 // pred_check_branch
          %531 = sbr.rel (%p529) target = $region80
        $region79: #{tpu_custom_call.1} parent=59 // pred_region
          %533 = dma.done %s525, 256
        $region80: #{tpu_custom_call.1} parent=59 // pred_fallthru
          _
        %s534 = sand.u32 %s24, 1
        %s535 = scalar_lea.sflag [#allocation4], %s534
        %s536 = sand.u32 %s278, 1
        %s537 = smul.addr %s536, 8
        %s538 = scalar_lea.vmem [#allocation11], %s537
        // Predicated region
        $region81: #{tpu_custom_call.1} parent=59 // pred_check
          %p539 = pneg %p291
        $region82: #{tpu_custom_call.1} parent=59 // pred_check_branch
          %541 = sbr.rel (%p539) target = $region84
        $region83: #{tpu_custom_call.1} parent=59 // pred_region
          %543 = dma.done %s535, 128
        $region84: #{tpu_custom_call.1} parent=59 // pred_fallthru
          _
        %p544 = pneg %p57
        %p545 = pneg %p54
        %p546 = pneg %p83
        %p547 = pneg %p80
        %p548 = scmp.lt.s32.totalorder %s29, 1
        %s549 = scalar_select %p548, %s29, 1
        %s550 = smul.addr %s549, 4
        %s551 = smul.addr %s550, 4
        %s552 = scalar_lea.vmem %s2, %s551
        %p553 = pneg %p109
        %p554 = pneg %p106
        %p555 = scmp.lt.s32.totalorder %s29, 1
        %s556 = scalar_select %p555, %s29, 1
        %s557 = smul.addr %s556, 4
        %s558 = smul.addr %s557, 4
        %s559 = scalar_lea.vmem %s3, %s558
        %p560 = pneg %p135
        %p561 = pneg %p132
        %p562 = scmp.lt.s32.totalorder %s29, 1
        %s563 = scalar_select %p562, %s29, 1
        %s564 = smul.addr %s563, 4
        %s565 = smul.addr %s564, 4
        %s566 = scalar_lea.vmem %s4, %s565
        %p567 = pneg %p161
        %p568 = pneg %p158
        %s569 = sand.u32 %s24, 1
        %s570 = scalar_lea.sflag [#allocation4], %s569
        %s571 = sand.u32 %s174, 1
        %s572 = smul.addr %s571, 16
        %s573 = scalar_lea.vmem [#allocation8], %s572
        %p574 = pneg %p187
        %p575 = pneg %p184
        %s576 = sand.u32 %s24, 1
        %s577 = scalar_lea.sflag [#allocation4], %s576
        %s578 = sand.u32 %s200, 1
        %s579 = smul.addr %s578, 16
        %s580 = scalar_lea.vmem [#allocation9], %s579
        %p581 = pneg %p213
        %p582 = pneg %p210
        %p583 = scmp.lt.s32.totalorder %s29, 1
        %s584 = scalar_select %p583, %s29, 1
        %s585 = smul.addr %s584, 8
        %s586 = smul.addr %s585, 4
        %s587 = scalar_lea.vmem %s7, %s586
        %p588 = pneg %p239
        %p589 = pneg %p236
        %s590 = sand.u32 %s24, 1
        %s591 = scalar_lea.sflag [#allocation4], %s590
        %s592 = sand.u32 %s252, 1
        %s593 = smul.addr %s592, 16
        %s594 = scalar_lea.vmem [#allocation10], %s593
        %p595 = pneg %p265
        %p596 = pneg %p262
        %s597 = sand.u32 %s24, 1
        %s598 = scalar_lea.sflag [#allocation4], %s597
        %s599 = sand.u32 %s278, 1
        %s600 = smul.addr %s599, 8
        %s601 = scalar_lea.vmem [#allocation11], %s600
        %p602 = pneg %p291
        %p603 = pneg %p288
        %p604 = pneg %p317
        %p605 = pneg %p314
        %s606 = smul.u32 2, %s28
        %s607 = smul.u32 2, %s28
        %p608 = scmp.lt.s32.totalorder %s29, 1
        %s609 = scalar_select %p608, %s29, 1
        %s610 = smul.addr %s609, 4
        %s611 = smul.addr %s610, 4
        %s612 = scalar_lea.vmem %s2, %s611
        %p613 = scmp.lt.s32.totalorder %s29, 1
        %s614 = scalar_select %p613, %s29, 1
        %s615 = smul.addr %s614, 4
        %s616 = smul.addr %s615, 4
        %s617 = scalar_lea.vmem %s3, %s616
        %p618 = scmp.lt.s32.totalorder %s29, 1
        %s619 = scalar_select %p618, %s29, 1
        %s620 = smul.addr %s619, 4
        %s621 = smul.addr %s620, 4
        %s622 = scalar_lea.vmem %s4, %s621
        %p623 = scmp.lt.s32.totalorder %s29, 1
        %s624 = scalar_select %p623, %s29, 1
        %s625 = smul.addr %s624, 8
        %s626 = smul.addr %s625, 4
        %s627 = scalar_lea.vmem %s7, %s626
        %s628 = smul.u32 2, %s28
        %p630 = scmp.eq.s32.totalorder %s29, 0
        // Predicated region
        $region85: #{tpu_custom_call.1} parent=59 // pred_check
          %p631 = pneg %p630
        $region86: #{tpu_custom_call.1} parent=59 // pred_check_branch
          %633 = sbr.rel (%p631) target = $region88
        $region87: #{tpu_custom_call.1} parent=59 // pred_region
          %v634 = vld [vmem:[#allocation3] sm:$0xff]
          %v635 = vld [vmem:[#allocation3 + $0x8] sm:$0xff]
          %vm636 = vcmask 261120
          %637 = vst.msk [vmem:[#allocation2] sm:$0xff] %vm636, %v634
          %638 = vst.msk [vmem:[#allocation2 + $0x8] sm:$0xff] %vm636, %v635
        $region88: #{tpu_custom_call.1} parent=59 // pred_fallthru
          _
        %v639 = vld [vmem:[%s612] sm:$0xf]
        %v640 = vld [vmem:[%s612 + $0x4] sm:$0xf]
        %v641 = vld [vmem:[%s612 + $0x8] sm:$0xf]
        %v642 = vld [vmem:[%s612 + $0xc] sm:$0xf]
        %v643 = vld [vmem:[%s617] sm:$0xf]
        %v644 = vld [vmem:[%s617 + $0x4] sm:$0xf]
        %v645 = vld [vmem:[%s617 + $0x8] sm:$0xf]
        %v646 = vld [vmem:[%s617 + $0xc] sm:$0xf]
        %v647 = vld [vmem:[%s622] sm:$0xf]
        %v648 = vld [vmem:[%s622 + $0x4] sm:$0xf]
        %v649 = vld [vmem:[%s622 + $0x8] sm:$0xf]
        %v650 = vld [vmem:[%s622 + $0xc] sm:$0xf]
        %v651 = vld [vmem:[%s508] sm:$0xf]
        %v652 = vld [vmem:[%s508 + $0x4] sm:$0xf]
        %v653 = vld [vmem:[%s508 + $0x8] sm:$0xf]
        %v654 = vld [vmem:[%s508 + $0xc] sm:$0xf]
        %v655 = vld [vmem:[%s518] sm:$0xf]
        %v656 = vld [vmem:[%s518 + $0x4] sm:$0xf]
        %v657 = vld [vmem:[%s518 + $0x8] sm:$0xf]
        %v658 = vld [vmem:[%s518 + $0xc] sm:$0xf]
        %v659 = vld [vmem:[%s627] sm:$0xf]
        %v660 = vld [vmem:[%s627 + $0x4] sm:$0xf]
        %v661 = vld [vmem:[%s627 + $0x8] sm:$0xf]
        %v662 = vld [vmem:[%s627 + $0xc] sm:$0xf]
        %v663 = vld [vmem:[%s627 + $0x10] sm:$0xf]
        %v664 = vld [vmem:[%s627 + $0x14] sm:$0xf]
        %v665 = vld [vmem:[%s627 + $0x18] sm:$0xf]
        %v666 = vld [vmem:[%s627 + $0x1c] sm:$0xf]
        %v667 = vld [vmem:[%s528] sm:$0xff]
        %v668 = vld [vmem:[%s528 + $0x8] sm:$0xff]
        %v669 = vld [vmem:[%s538] sm:$0xff]
        %v670 = vld [vmem:[#allocation2] sm:$0xff]
        %v671 = vld [vmem:[#allocation2 + $0x8] sm:$0xff]
        %v672 = vld [vmem:[#allocation6] sm:$0xff]
        %v673 = vld [vmem:[#allocation6 + $0x8] sm:$0xff]
        %v674 = vadd.f32 %v670, %v672
        %v675 = vadd.f32 %v671, %v673
        %v676 = vpack.c.bf16 %v674, %v674
        %v677 = vpack.c.bf16 %v675, %v675
        %v678 = vpack.c.bf16 %v670, %v670
        %v679 = vpack.c.bf16 %v671, %v671
        %v680 = vperm.slane %v667, 1
        %v683 = vunpack.c.l.b16 %v676
        %v684 = vunpack.c.l.b16 %v677
        %v685 = vpack.c.b16 %v684, %v683
        %v690 = vunpack.c.l.b16 %v643
        %v691 = vunpack.c.l.b16 %v644
        %v692 = vunpack.c.l.b16 %v645
        %v693 = vunpack.c.l.b16 %v646
        %v694 = vpack.c.b16 %v691, %v690
        %v695 = vpack.c.b16 %v693, %v692
        %vm698 = vcmask 261120
        %v700 = vsel %vm698, %v685, 0
        %702 = vmatpush.bf16.msra.mxu0 0
        %703 = vmatpush.bf16.msra.mxu0 0
        %704 = vmatpush.bf16.msra.mxu0 0
        %705 = vmatpush.bf16.msra.mxu0 0
        %706 = vmatpush.bf16.msra.mxu0 0
        %707 = vmatpush.bf16.msra.mxu0 0
        %708 = vmatpush.bf16.msra.mxu0 %v695
        %709 = vmatpush.bf16.msra.mxu0 %v694
        %710 = vmatmul.bf16.gmra.mxu0 %v700
        %v711 = vpop.f32.mrf.mxu0
        %v712 = vadd.f32 %v680, %v711
        %v713 = vpop.f32.mrf.mxu0
        %v714 = vadd.f32 %v680, %v713
        %715 = vdwg.mxu0
        %v716 = vperm.slane %v667, 2
        %v719 = vunpack.c.l.b16 %v678
        %v720 = vunpack.c.l.b16 %v679
        %v721 = vpack.c.b16 %v720, %v719
        %v726 = vunpack.c.l.b16 %v647
        %v727 = vunpack.c.l.b16 %v648
        %v728 = vunpack.c.l.b16 %v649
        %v729 = vunpack.c.l.b16 %v650
        %v730 = vpack.c.b16 %v727, %v726
        %v731 = vpack.c.b16 %v729, %v728
        %v735 = vsel %vm698, %v721, 0
        %737 = vmatpush.bf16.msra.mxu0 0
        %738 = vmatpush.bf16.msra.mxu0 0
        %739 = vmatpush.bf16.msra.mxu0 0
        %740 = vmatpush.bf16.msra.mxu0 0
        %741 = vmatpush.bf16.msra.mxu0 0
        %742 = vmatpush.bf16.msra.mxu0 0
        %743 = vmatpush.bf16.msra.mxu0 %v731
        %744 = vmatpush.bf16.msra.mxu0 %v730
        %745 = vmatmul.bf16.gmra.mxu0 %v735
        %v746 = vpop.f32.mrf.mxu0
        %v747 = vadd.f32 %v716, %v746
        %v748 = vpop.f32.mrf.mxu0
        %v749 = vadd.f32 %v716, %v748
        %750 = vdwg.mxu0
        %v751 = vpack.c.bf16 %v712, %v712
        %v752 = vpack.c.bf16 %v714, %v714
        %755 = vrot.lane.b32.xlu0 %v751, 120
        %v756 = vpop.permute.xlu0 %755
        %757 = vrot.lane.b32.xlu0 %v752, 120
        %v758 = vpop.permute.xlu0 %757
        %759 = vrot.lane.b32.xlu0 %v751, 112
        %v760 = vpop.permute.xlu0 %759
        %761 = vrot.lane.b32.xlu0 %v752, 112
        %v762 = vpop.permute.xlu0 %761
        %763 = vrot.lane.b32.xlu0 %v751, 104
        %v764 = vpop.permute.xlu0 %763
        %765 = vrot.lane.b32.xlu0 %v752, 104
        %v766 = vpop.permute.xlu0 %765
        %v769 = vpack.i.b16 %v756, %v751
        %v770 = vshrl.u32 %v751, 16
        %v771 = vshrl.u32 %v756, 16
        %v772 = vpack.i.b16 %v771, %v770
        %v775 = vpack.i.b16 %v764, %v760
        %v776 = vshrl.u32 %v760, 16
        %v777 = vshrl.u32 %v764, 16
        %v778 = vpack.i.b16 %v777, %v776
        %v781 = vpack.i.b16 %v758, %v752
        %v782 = vshrl.u32 %v752, 16
        %v783 = vshrl.u32 %v758, 16
        %v784 = vpack.i.b16 %v783, %v782
        %v787 = vpack.i.b16 %v766, %v762
        %v788 = vshrl.u32 %v762, 16
        %v789 = vshrl.u32 %v766, 16
        %v790 = vpack.i.b16 %v789, %v788
        %v793 = vunpack.c.l.s4 1983009808
        %v794 = vunpack.c.0.s8 %v793
        %v795 = vperm.slane %v769, %v794
        %v798 = vunpack.c.l.s4 1983009808
        %v799 = vunpack.c.0.s8 %v798
        %v800 = vperm.slane %v775, %v799
        %v801 = vrot.slane %v800, 4
        %vm802 = vcmask 1047556
        %v803 = vsel %vm802, %v801, %v795
        %v804 = vrot.slane %v795, 4
        %v805 = vsel %vm802, %v800, %v804
        %v807 = vunpack.c.l.s4 1934713408
        %v808 = vunpack.c.0.s8 %v807
        %v809 = vperm.slane %v803, %v808
        %v811 = vunpack.c.l.s4 1934713408
        %v812 = vunpack.c.0.s8 %v811
        %v813 = vperm.slane %v805, %v812
        %v814 = vrot.slane %v809, 4
        %v815 = vsel %vm802, 0, %v814
        %v816 = vrot.slane %v813, 4
        %v817 = vsel %vm802, 0, %v816
        %v820 = vunpack.c.l.s4 1983009808
        %v821 = vunpack.c.0.s8 %v820
        %v822 = vperm.slane %v772, %v821
        %v825 = vunpack.c.l.s4 1983009808
        %v826 = vunpack.c.0.s8 %v825
        %v827 = vperm.slane %v778, %v826
        %v828 = vrot.slane %v827, 4
        %v829 = vsel %vm802, %v828, %v822
        %v830 = vrot.slane %v822, 4
        %v831 = vsel %vm802, %v827, %v830
        %v833 = vunpack.c.l.s4 1934713408
        %v834 = vunpack.c.0.s8 %v833
        %v835 = vperm.slane %v829, %v834
        %v837 = vunpack.c.l.s4 1934713408
        %v838 = vunpack.c.0.s8 %v837
        %v839 = vperm.slane %v831, %v838
        %v840 = vrot.slane %v835, 4
        %v841 = vsel %vm802, 0, %v840
        %v842 = vrot.slane %v839, 4
        %v843 = vsel %vm802, 0, %v842
        %v846 = vunpack.c.l.s4 1983009808
        %v847 = vunpack.c.0.s8 %v846
        %v848 = vperm.slane %v781, %v847
        %v851 = vunpack.c.l.s4 1983009808
        %v852 = vunpack.c.0.s8 %v851
        %v853 = vperm.slane %v787, %v852
        %v854 = vrot.slane %v853, 4
        %v855 = vsel %vm802, %v854, %v848
        %v856 = vrot.slane %v848, 4
        %v857 = vsel %vm802, %v853, %v856
        %v859 = vunpack.c.l.s4 1934713408
        %v860 = vunpack.c.0.s8 %v859
        %v861 = vperm.slane %v855, %v860
        %v863 = vunpack.c.l.s4 1934713408
        %v864 = vunpack.c.0.s8 %v863
        %v865 = vperm.slane %v857, %v864
        %v866 = vrot.slane %v861, 4
        %v867 = vsel %vm802, 0, %v866
        %v868 = vrot.slane %v865, 4
        %v869 = vsel %vm802, 0, %v868
        %v872 = vunpack.c.l.s4 1983009808
        %v873 = vunpack.c.0.s8 %v872
        %v874 = vperm.slane %v784, %v873
        %v877 = vunpack.c.l.s4 1983009808
        %v878 = vunpack.c.0.s8 %v877
        %v879 = vperm.slane %v790, %v878
        %v880 = vrot.slane %v879, 4
        %v881 = vsel %vm802, %v880, %v874
        %v882 = vrot.slane %v874, 4
        %v883 = vsel %vm802, %v879, %v882
        %v885 = vunpack.c.l.s4 1934713408
        %v886 = vunpack.c.0.s8 %v885
        %v887 = vperm.slane %v881, %v886
        %v889 = vunpack.c.l.s4 1934713408
        %v890 = vunpack.c.0.s8 %v889
        %v891 = vperm.slane %v883, %v890
        %v892 = vrot.slane %v887, 4
        %v893 = vsel %vm802, 0, %v892
        %v894 = vrot.slane %v891, 4
        %v895 = vsel %vm802, 0, %v894
        %v896 = vsel %vm802, %v816, %v809
        %v898 = vunpack.c.l.s4 1983009808
        %v899 = vunpack.c.0.s8 %v898
        %v900 = vperm.slane %v896, %v899
        %v901 = vrot.slane %v817, 4
        %v902 = vsel %vm802, %v901, %v815
        %v904 = vunpack.c.l.s4 1983009808
        %v905 = vunpack.c.0.s8 %v904
        %v906 = vperm.slane %v902, %v905
        %v907 = vrot.slane %v906, 4
        %v908 = vsel %vm802, %v907, %v900
        %v910 = vunpack.c.l.s4 1934713408
        %v911 = vunpack.c.0.s8 %v910
        %v912 = vperm.slane %v908, %v911
        %v913 = vrot.slane %v912, 4
        %v914 = vsel %vm802, 0, %v913
        %v915 = vsel %vm802, %v842, %v835
        %v917 = vunpack.c.l.s4 1983009808
        %v918 = vunpack.c.0.s8 %v917
        %v919 = vperm.slane %v915, %v918
        %v920 = vrot.slane %v843, 4
        %v921 = vsel %vm802, %v920, %v841
        %v923 = vunpack.c.l.s4 1983009808
        %v924 = vunpack.c.0.s8 %v923
        %v925 = vperm.slane %v921, %v924
        %v926 = vrot.slane %v925, 4
        %v927 = vsel %vm802, %v926, %v919
        %v929 = vunpack.c.l.s4 1934713408
        %v930 = vunpack.c.0.s8 %v929
        %v931 = vperm.slane %v927, %v930
        %v932 = vrot.slane %v931, 4
        %v933 = vsel %vm802, 0, %v932
        %v934 = vsel %vm802, %v868, %v861
        %v936 = vunpack.c.l.s4 1983009808
        %v937 = vunpack.c.0.s8 %v936
        %v938 = vperm.slane %v934, %v937
        %v939 = vrot.slane %v869, 4
        %v940 = vsel %vm802, %v939, %v867
        %v942 = vunpack.c.l.s4 1983009808
        %v943 = vunpack.c.0.s8 %v942
        %v944 = vperm.slane %v940, %v943
        %v945 = vrot.slane %v944, 4
        %v946 = vsel %vm802, %v945, %v938
        %v948 = vunpack.c.l.s4 1934713408
        %v949 = vunpack.c.0.s8 %v948
        %v950 = vperm.slane %v946, %v949
        %v951 = vrot.slane %v950, 4
        %v952 = vsel %vm802, 0, %v951
        %v953 = vsel %vm802, %v894, %v887
        %v955 = vunpack.c.l.s4 1983009808
        %v956 = vunpack.c.0.s8 %v955
        %v957 = vperm.slane %v953, %v956
        %v958 = vrot.slane %v895, 4
        %v959 = vsel %vm802, %v958, %v893
        %v961 = vunpack.c.l.s4 1983009808
        %v962 = vunpack.c.0.s8 %v961
        %v963 = vperm.slane %v959, %v962
        %v964 = vrot.slane %v963, 4
        %v965 = vsel %vm802, %v964, %v957
        %v967 = vunpack.c.l.s4 1934713408
        %v968 = vunpack.c.0.s8 %v967
        %v969 = vperm.slane %v965, %v968
        %v970 = vrot.slane %v969, 4
        %v971 = vsel %vm802, 0, %v970
        %v974 = vpack.i.b16 %v931, %v912
        %v975 = vshrl.u32 %v912, 16
        %v976 = vshrl.u32 %v931, 16
        %v977 = vpack.i.b16 %v976, %v975
        %v980 = vpack.i.b16 %v933, %v914
        %v981 = vshrl.u32 %v914, 16
        %v982 = vshrl.u32 %v933, 16
        %v983 = vpack.i.b16 %v982, %v981
        %v986 = vpack.i.b16 %v969, %v950
        %v987 = vshrl.u32 %v950, 16
        %v988 = vshrl.u32 %v969, 16
        %v989 = vpack.i.b16 %v988, %v987
        %v992 = vpack.i.b16 %v971, %v952
        %v993 = vshrl.u32 %v952, 16
        %v994 = vshrl.u32 %v971, 16
        %v995 = vpack.i.b16 %v994, %v993
        %v996 = vpack.c.bf16 %v747, %v747
        %v997 = vpack.c.bf16 %v749, %v749
        %1000 = vrot.lane.b32.xlu0 %v996, 120
        %v1001 = vpop.permute.xlu0 %1000
        %1002 = vrot.lane.b32.xlu0 %v997, 120
        %v1003 = vpop.permute.xlu0 %1002
        %1004 = vrot.lane.b32.xlu0 %v996, 112
        %v1005 = vpop.permute.xlu0 %1004
        %1006 = vrot.lane.b32.xlu0 %v997, 112
        %v1007 = vpop.permute.xlu0 %1006
        %1008 = vrot.lane.b32.xlu0 %v996, 104
        %v1009 = vpop.permute.xlu0 %1008
        %1010 = vrot.lane.b32.xlu0 %v997, 104
        %v1011 = vpop.permute.xlu0 %1010
        %v1014 = vpack.i.b16 %v1001, %v996
        %v1015 = vshrl.u32 %v996, 16
        %v1016 = vshrl.u32 %v1001, 16
        %v1017 = vpack.i.b16 %v1016, %v1015
        %v1020 = vpack.i.b16 %v1009, %v1005
        %v1021 = vshrl.u32 %v1005, 16
        %v1022 = vshrl.u32 %v1009, 16
        %v1023 = vpack.i.b16 %v1022, %v1021
        %v1026 = vpack.i.b16 %v1003, %v997
        %v1027 = vshrl.u32 %v997, 16
        %v1028 = vshrl.u32 %v1003, 16
        %v1029 = vpack.i.b16 %v1028, %v1027
        %v1032 = vpack.i.b16 %v1011, %v1007
        %v1033 = vshrl.u32 %v1007, 16
        %v1034 = vshrl.u32 %v1011, 16
        %v1035 = vpack.i.b16 %v1034, %v1033
        %v1038 = vunpack.c.l.s4 1983009808
        %v1039 = vunpack.c.0.s8 %v1038
        %v1040 = vperm.slane %v1014, %v1039
        %v1043 = vunpack.c.l.s4 1983009808
        %v1044 = vunpack.c.0.s8 %v1043
        %v1045 = vperm.slane %v1020, %v1044
        %v1046 = vrot.slane %v1045, 4
        %v1047 = vsel %vm802, %v1046, %v1040
        %v1048 = vrot.slane %v1040, 4
        %v1049 = vsel %vm802, %v1045, %v1048
        %v1051 = vunpack.c.l.s4 1934713408
        %v1052 = vunpack.c.0.s8 %v1051
        %v1053 = vperm.slane %v1047, %v1052
        %v1055 = vunpack.c.l.s4 1934713408
        %v1056 = vunpack.c.0.s8 %v1055
        %v1057 = vperm.slane %v1049, %v1056
        %v1058 = vrot.slane %v1053, 4
        %v1059 = vsel %vm802, 0, %v1058
        %v1060 = vrot.slane %v1057, 4
        %v1061 = vsel %vm802, 0, %v1060
        %v1064 = vunpack.c.l.s4 1983009808
        %v1065 = vunpack.c.0.s8 %v1064
        %v1066 = vperm.slane %v1017, %v1065
        %v1069 = vunpack.c.l.s4 1983009808
        %v1070 = vunpack.c.0.s8 %v1069
        %v1071 = vperm.slane %v1023, %v1070
        %v1072 = vrot.slane %v1071, 4
        %v1073 = vsel %vm802, %v1072, %v1066
        %v1074 = vrot.slane %v1066, 4
        %v1075 = vsel %vm802, %v1071, %v1074
        %v1077 = vunpack.c.l.s4 1934713408
        %v1078 = vunpack.c.0.s8 %v1077
        %v1079 = vperm.slane %v1073, %v1078
        %v1081 = vunpack.c.l.s4 1934713408
        %v1082 = vunpack.c.0.s8 %v1081
        %v1083 = vperm.slane %v1075, %v1082
        %v1084 = vrot.slane %v1079, 4
        %v1085 = vsel %vm802, 0, %v1084
        %v1086 = vrot.slane %v1083, 4
        %v1087 = vsel %vm802, 0, %v1086
        %v1090 = vunpack.c.l.s4 1983009808
        %v1091 = vunpack.c.0.s8 %v1090
        %v1092 = vperm.slane %v1026, %v1091
        %v1095 = vunpack.c.l.s4 1983009808
        %v1096 = vunpack.c.0.s8 %v1095
        %v1097 = vperm.slane %v1032, %v1096
        %v1098 = vrot.slane %v1097, 4
        %v1099 = vsel %vm802, %v1098, %v1092
        %v1100 = vrot.slane %v1092, 4
        %v1101 = vsel %vm802, %v1097, %v1100
        %v1103 = vunpack.c.l.s4 1934713408
        %v1104 = vunpack.c.0.s8 %v1103
        %v1105 = vperm.slane %v1099, %v1104
        %v1107 = vunpack.c.l.s4 1934713408
        %v1108 = vunpack.c.0.s8 %v1107
        %v1109 = vperm.slane %v1101, %v1108
        %v1110 = vrot.slane %v1105, 4
        %v1111 = vsel %vm802, 0, %v1110
        %v1112 = vrot.slane %v1109, 4
        %v1113 = vsel %vm802, 0, %v1112
        %v1116 = vunpack.c.l.s4 1983009808
        %v1117 = vunpack.c.0.s8 %v1116
        %v1118 = vperm.slane %v1029, %v1117
        %v1121 = vunpack.c.l.s4 1983009808
        %v1122 = vunpack.c.0.s8 %v1121
        %v1123 = vperm.slane %v1035, %v1122
        %v1124 = vrot.slane %v1123, 4
        %v1125 = vsel %vm802, %v1124, %v1118
        %v1126 = vrot.slane %v1118, 4
        %v1127 = vsel %vm802, %v1123, %v1126
        %v1129 = vunpack.c.l.s4 1934713408
        %v1130 = vunpack.c.0.s8 %v1129
        %v1131 = vperm.slane %v1125, %v1130
        %v1133 = vunpack.c.l.s4 1934713408
        %v1134 = vunpack.c.0.s8 %v1133
        %v1135 = vperm.slane %v1127, %v1134
        %v1136 = vrot.slane %v1131, 4
        %v1137 = vsel %vm802, 0, %v1136
        %v1138 = vrot.slane %v1135, 4
        %v1139 = vsel %vm802, 0, %v1138
        %v1140 = vsel %vm802, %v1060, %v1053
        %v1142 = vunpack.c.l.s4 1983009808
        %v1143 = vunpack.c.0.s8 %v1142
        %v1144 = vperm.slane %v1140, %v1143
        %v1145 = vrot.slane %v1061, 4
        %v1146 = vsel %vm802, %v1145, %v1059
        %v1148 = vunpack.c.l.s4 1983009808
        %v1149 = vunpack.c.0.s8 %v1148
        %v1150 = vperm.slane %v1146, %v1149
        %v1151 = vrot.slane %v1150, 4
        %v1152 = vsel %vm802, %v1151, %v1144
        %v1154 = vunpack.c.l.s4 1934713408
        %v1155 = vunpack.c.0.s8 %v1154
        %v1156 = vperm.slane %v1152, %v1155
        %v1157 = vrot.slane %v1156, 4
        %v1158 = vsel %vm802, 0, %v1157
        %v1159 = vsel %vm802, %v1086, %v1079
        %v1161 = vunpack.c.l.s4 1983009808
        %v1162 = vunpack.c.0.s8 %v1161
        %v1163 = vperm.slane %v1159, %v1162
        %v1164 = vrot.slane %v1087, 4
        %v1165 = vsel %vm802, %v1164, %v1085
        %v1167 = vunpack.c.l.s4 1983009808
        %v1168 = vunpack.c.0.s8 %v1167
        %v1169 = vperm.slane %v1165, %v1168
        %v1170 = vrot.slane %v1169, 4
        %v1171 = vsel %vm802, %v1170, %v1163
        %v1173 = vunpack.c.l.s4 1934713408
        %v1174 = vunpack.c.0.s8 %v1173
        %v1175 = vperm.slane %v1171, %v1174
        %v1176 = vrot.slane %v1175, 4
        %v1177 = vsel %vm802, 0, %v1176
        %v1178 = vsel %vm802, %v1112, %v1105
        %v1180 = vunpack.c.l.s4 1983009808
        %v1181 = vunpack.c.0.s8 %v1180
        %v1182 = vperm.slane %v1178, %v1181
        %v1183 = vrot.slane %v1113, 4
        %v1184 = vsel %vm802, %v1183, %v1111
        %v1186 = vunpack.c.l.s4 1983009808
        %v1187 = vunpack.c.0.s8 %v1186
        %v1188 = vperm.slane %v1184, %v1187
        %v1189 = vrot.slane %v1188, 4
        %v1190 = vsel %vm802, %v1189, %v1182
        %v1192 = vunpack.c.l.s4 1934713408
        %v1193 = vunpack.c.0.s8 %v1192
        %v1194 = vperm.slane %v1190, %v1193
        %v1195 = vrot.slane %v1194, 4
        %v1196 = vsel %vm802, 0, %v1195
        %v1197 = vsel %vm802, %v1138, %v1131
        %v1199 = vunpack.c.l.s4 1983009808
        %v1200 = vunpack.c.0.s8 %v1199
        %v1201 = vperm.slane %v1197, %v1200
        %v1202 = vrot.slane %v1139, 4
        %v1203 = vsel %vm802, %v1202, %v1137
        %v1205 = vunpack.c.l.s4 1983009808
        %v1206 = vunpack.c.0.s8 %v1205
        %v1207 = vperm.slane %v1203, %v1206
        %v1208 = vrot.slane %v1207, 4
        %v1209 = vsel %vm802, %v1208, %v1201
        %v1211 = vunpack.c.l.s4 1934713408
        %v1212 = vunpack.c.0.s8 %v1211
        %v1213 = vperm.slane %v1209, %v1212
        %v1214 = vrot.slane %v1213, 4
        %v1215 = vsel %vm802, 0, %v1214
        %v1218 = vpack.i.b16 %v1175, %v1156
        %v1219 = vshrl.u32 %v1156, 16
        %v1220 = vshrl.u32 %v1175, 16
        %v1221 = vpack.i.b16 %v1220, %v1219
        %v1224 = vpack.i.b16 %v1177, %v1158
        %v1225 = vshrl.u32 %v1158, 16
        %v1226 = vshrl.u32 %v1177, 16
        %v1227 = vpack.i.b16 %v1226, %v1225
        %v1230 = vpack.i.b16 %v1213, %v1194
        %v1231 = vshrl.u32 %v1194, 16
        %v1232 = vshrl.u32 %v1213, 16
        %v1233 = vpack.i.b16 %v1232, %v1231
        %v1236 = vpack.i.b16 %v1215, %v1196
        %v1237 = vshrl.u32 %v1196, 16
        %v1238 = vshrl.u32 %v1215, 16
        %v1239 = vpack.i.b16 %v1238, %v1237
        %v1240 = vperm.slane %v667, 0
        %v1245 = vunpack.c.l.b16 %v639
        %v1246 = vunpack.c.l.b16 %v640
        %v1247 = vunpack.c.l.b16 %v641
        %v1248 = vunpack.c.l.b16 %v642
        %v1249 = vpack.c.b16 %v1246, %v1245
        %v1250 = vpack.c.b16 %v1248, %v1247
        %1253 = vmatpush.bf16.msra.mxu0 0
        %1254 = vmatpush.bf16.msra.mxu0 0
        %1255 = vmatpush.bf16.msra.mxu0 0
        %1256 = vmatpush.bf16.msra.mxu0 0
        %1257 = vmatpush.bf16.msra.mxu0 0
        %1258 = vmatpush.bf16.msra.mxu0 0
        %1259 = vmatpush.bf16.msra.mxu0 %v1250
        %1260 = vmatpush.bf16.msra.mxu0 %v1249
        %1261 = vmatmul.bf16.gmra.mxu0 %v700
        %v1262 = vpop.f32.mrf.mxu0
        %v1263 = vadd.f32 %v1240, %v1262
        %v1264 = vpop.f32.mrf.mxu0
        %v1265 = vadd.f32 %v1240, %v1264
        %1266 = vdwg.mxu0
        %v1267 = vmul.f32 %v1263, 0.35355338
        %v1268 = vmul.f32 %v1265, 0.35355338
        %v1269 = vpack.c.bf16 %v1267, %v1267
        %v1270 = vpack.c.bf16 %v1268, %v1268
        %1273 = vrot.lane.b32.xlu0 %v1269, 120
        %v1274 = vpop.permute.xlu0 %1273
        %1275 = vrot.lane.b32.xlu0 %v1270, 120
        %v1276 = vpop.permute.xlu0 %1275
        %1277 = vrot.lane.b32.xlu0 %v1269, 112
        %v1278 = vpop.permute.xlu0 %1277
        %1279 = vrot.lane.b32.xlu0 %v1270, 112
        %v1280 = vpop.permute.xlu0 %1279
        %1281 = vrot.lane.b32.xlu0 %v1269, 104
        %v1282 = vpop.permute.xlu0 %1281
        %1283 = vrot.lane.b32.xlu0 %v1270, 104
        %v1284 = vpop.permute.xlu0 %1283
        %v1287 = vpack.i.b16 %v1274, %v1269
        %v1288 = vshrl.u32 %v1269, 16
        %v1289 = vshrl.u32 %v1274, 16
        %v1290 = vpack.i.b16 %v1289, %v1288
        %v1293 = vpack.i.b16 %v1282, %v1278
        %v1294 = vshrl.u32 %v1278, 16
        %v1295 = vshrl.u32 %v1282, 16
        %v1296 = vpack.i.b16 %v1295, %v1294
        %v1299 = vpack.i.b16 %v1276, %v1270
        %v1300 = vshrl.u32 %v1270, 16
        %v1301 = vshrl.u32 %v1276, 16
        %v1302 = vpack.i.b16 %v1301, %v1300
        %v1305 = vpack.i.b16 %v1284, %v1280
        %v1306 = vshrl.u32 %v1280, 16
        %v1307 = vshrl.u32 %v1284, 16
        %v1308 = vpack.i.b16 %v1307, %v1306
        %v1311 = vunpack.c.l.s4 1983009808
        %v1312 = vunpack.c.0.s8 %v1311
        %v1313 = vperm.slane %v1287, %v1312
        %v1316 = vunpack.c.l.s4 1983009808
        %v1317 = vunpack.c.0.s8 %v1316
        %v1318 = vperm.slane %v1293, %v1317
        %v1319 = vrot.slane %v1318, 4
        %v1320 = vsel %vm802, %v1319, %v1313
        %v1321 = vrot.slane %v1313, 4
        %v1322 = vsel %vm802, %v1318, %v1321
        %v1324 = vunpack.c.l.s4 1934713408
        %v1325 = vunpack.c.0.s8 %v1324
        %v1326 = vperm.slane %v1320, %v1325
        %v1328 = vunpack.c.l.s4 1934713408
        %v1329 = vunpack.c.0.s8 %v1328
        %v1330 = vperm.slane %v1322, %v1329
        %v1331 = vrot.slane %v1326, 4
        %v1332 = vsel %vm802, 0, %v1331
        %v1333 = vrot.slane %v1330, 4
        %v1334 = vsel %vm802, 0, %v1333
        %v1337 = vunpack.c.l.s4 1983009808
        %v1338 = vunpack.c.0.s8 %v1337
        %v1339 = vperm.slane %v1290, %v1338
        %v1342 = vunpack.c.l.s4 1983009808
        %v1343 = vunpack.c.0.s8 %v1342
        %v1344 = vperm.slane %v1296, %v1343
        %v1345 = vrot.slane %v1344, 4
        %v1346 = vsel %vm802, %v1345, %v1339
        %v1347 = vrot.slane %v1339, 4
        %v1348 = vsel %vm802, %v1344, %v1347
        %v1350 = vunpack.c.l.s4 1934713408
        %v1351 = vunpack.c.0.s8 %v1350
        %v1352 = vperm.slane %v1346, %v1351
        %v1354 = vunpack.c.l.s4 1934713408
        %v1355 = vunpack.c.0.s8 %v1354
        %v1356 = vperm.slane %v1348, %v1355
        %v1357 = vrot.slane %v1352, 4
        %v1358 = vsel %vm802, 0, %v1357
        %v1359 = vrot.slane %v1356, 4
        %v1360 = vsel %vm802, 0, %v1359
        %v1363 = vunpack.c.l.s4 1983009808
        %v1364 = vunpack.c.0.s8 %v1363
        %v1365 = vperm.slane %v1299, %v1364
        %v1368 = vunpack.c.l.s4 1983009808
        %v1369 = vunpack.c.0.s8 %v1368
        %v1370 = vperm.slane %v1305, %v1369
        %v1371 = vrot.slane %v1370, 4
        %v1372 = vsel %vm802, %v1371, %v1365
        %v1373 = vrot.slane %v1365, 4
        %v1374 = vsel %vm802, %v1370, %v1373
        %v1376 = vunpack.c.l.s4 1934713408
        %v1377 = vunpack.c.0.s8 %v1376
        %v1378 = vperm.slane %v1372, %v1377
        %v1380 = vunpack.c.l.s4 1934713408
        %v1381 = vunpack.c.0.s8 %v1380
        %v1382 = vperm.slane %v1374, %v1381
        %v1383 = vrot.slane %v1378, 4
        %v1384 = vsel %vm802, 0, %v1383
        %v1385 = vrot.slane %v1382, 4
        %v1386 = vsel %vm802, 0, %v1385
        %v1389 = vunpack.c.l.s4 1983009808
        %v1390 = vunpack.c.0.s8 %v1389
        %v1391 = vperm.slane %v1302, %v1390
        %v1394 = vunpack.c.l.s4 1983009808
        %v1395 = vunpack.c.0.s8 %v1394
        %v1396 = vperm.slane %v1308, %v1395
        %v1397 = vrot.slane %v1396, 4
        %v1398 = vsel %vm802, %v1397, %v1391
        %v1399 = vrot.slane %v1391, 4
        %v1400 = vsel %vm802, %v1396, %v1399
        %v1402 = vunpack.c.l.s4 1934713408
        %v1403 = vunpack.c.0.s8 %v1402
        %v1404 = vperm.slane %v1398, %v1403
        %v1406 = vunpack.c.l.s4 1934713408
        %v1407 = vunpack.c.0.s8 %v1406
        %v1408 = vperm.slane %v1400, %v1407
        %v1409 = vrot.slane %v1404, 4
        %v1410 = vsel %vm802, 0, %v1409
        %v1411 = vrot.slane %v1408, 4
        %v1412 = vsel %vm802, 0, %v1411
        %v1413 = vsel %vm802, %v1333, %v1326
        %v1415 = vunpack.c.l.s4 1983009808
        %v1416 = vunpack.c.0.s8 %v1415
        %v1417 = vperm.slane %v1413, %v1416
        %v1418 = vrot.slane %v1334, 4
        %v1419 = vsel %vm802, %v1418, %v1332
        %v1421 = vunpack.c.l.s4 1983009808
        %v1422 = vunpack.c.0.s8 %v1421
        %v1423 = vperm.slane %v1419, %v1422
        %v1424 = vrot.slane %v1423, 4
        %v1425 = vsel %vm802, %v1424, %v1417
        %v1427 = vunpack.c.l.s4 1934713408
        %v1428 = vunpack.c.0.s8 %v1427
        %v1429 = vperm.slane %v1425, %v1428
        %v1430 = vrot.slane %v1429, 4
        %v1431 = vsel %vm802, 0, %v1430
        %v1432 = vsel %vm802, %v1359, %v1352
        %v1434 = vunpack.c.l.s4 1983009808
        %v1435 = vunpack.c.0.s8 %v1434
        %v1436 = vperm.slane %v1432, %v1435
        %v1437 = vrot.slane %v1360, 4
        %v1438 = vsel %vm802, %v1437, %v1358
        %v1440 = vunpack.c.l.s4 1983009808
        %v1441 = vunpack.c.0.s8 %v1440
        %v1442 = vperm.slane %v1438, %v1441
        %v1443 = vrot.slane %v1442, 4
        %v1444 = vsel %vm802, %v1443, %v1436
        %v1446 = vunpack.c.l.s4 1934713408
        %v1447 = vunpack.c.0.s8 %v1446
        %v1448 = vperm.slane %v1444, %v1447
        %v1449 = vrot.slane %v1448, 4
        %v1450 = vsel %vm802, 0, %v1449
        %v1451 = vsel %vm802, %v1385, %v1378
        %v1453 = vunpack.c.l.s4 1983009808
        %v1454 = vunpack.c.0.s8 %v1453
        %v1455 = vperm.slane %v1451, %v1454
        %v1456 = vrot.slane %v1386, 4
        %v1457 = vsel %vm802, %v1456, %v1384
        %v1459 = vunpack.c.l.s4 1983009808
        %v1460 = vunpack.c.0.s8 %v1459
        %v1461 = vperm.slane %v1457, %v1460
        %v1462 = vrot.slane %v1461, 4
        %v1463 = vsel %vm802, %v1462, %v1455
        %v1465 = vunpack.c.l.s4 1934713408
        %v1466 = vunpack.c.0.s8 %v1465
        %v1467 = vperm.slane %v1463, %v1466
        %v1468 = vrot.slane %v1467, 4
        %v1469 = vsel %vm802, 0, %v1468
        %v1470 = vsel %vm802, %v1411, %v1404
        %v1472 = vunpack.c.l.s4 1983009808
        %v1473 = vunpack.c.0.s8 %v1472
        %v1474 = vperm.slane %v1470, %v1473
        %v1475 = vrot.slane %v1412, 4
        %v1476 = vsel %vm802, %v1475, %v1410
        %v1478 = vunpack.c.l.s4 1983009808
        %v1479 = vunpack.c.0.s8 %v1478
        %v1480 = vperm.slane %v1476, %v1479
        %v1481 = vrot.slane %v1480, 4
        %v1482 = vsel %vm802, %v1481, %v1474
        %v1484 = vunpack.c.l.s4 1934713408
        %v1485 = vunpack.c.0.s8 %v1484
        %v1486 = vperm.slane %v1482, %v1485
        %v1487 = vrot.slane %v1486, 4
        %v1488 = vsel %vm802, 0, %v1487
        %v1491 = vpack.i.b16 %v1448, %v1429
        %v1492 = vshrl.u32 %v1429, 16
        %v1493 = vshrl.u32 %v1448, 16
        %v1494 = vpack.i.b16 %v1493, %v1492
        %v1497 = vpack.i.b16 %v1450, %v1431
        %v1498 = vshrl.u32 %v1431, 16
        %v1499 = vshrl.u32 %v1450, 16
        %v1500 = vpack.i.b16 %v1499, %v1498
        %v1503 = vpack.i.b16 %v1486, %v1467
        %v1504 = vshrl.u32 %v1467, 16
        %v1505 = vshrl.u32 %v1486, 16
        %v1506 = vpack.i.b16 %v1505, %v1504
        %v1509 = vpack.i.b16 %v1488, %v1469
        %v1510 = vshrl.u32 %v1469, 16
        %v1511 = vshrl.u32 %v1488, 16
        %v1512 = vpack.i.b16 %v1511, %v1510
        %vm1513 = vcmask 64512
        %v1515 = vsel %vm1513, %v1491, 0
        %v1518 = vsel %vm1513, %v974, 0
        %1520 = vmatpush.bf16.xpose.msra.mxu0 0
        %1521 = vmatpush.bf16.xpose.msra.mxu0 0
        %1522 = vmatpush.bf16.xpose.msra.mxu0 0
        %1523 = vmatpush.bf16.xpose.msra.mxu0 0
        %1524 = vmatpush.bf16.xpose.msra.mxu0 0
        %1525 = vmatpush.bf16.xpose.msra.mxu0 0
        %1526 = vmatpush.bf16.xpose.msra.mxu0 0
        %1527 = vmatpush.bf16.xpose.msra.mxu0 %v1518
        %1528 = vmatmul.bf16.gmra.mxu0 %v1515
        %v1529 = vpop.f32.mrf.mxu0
        %v1530 = vadd.f32 0.0, %v1529
        %v1531 = vpop.f32.mrf.mxu0
        %1532 = vdwg.mxu0
        %v1534 = vsel %vm1513, %v1494, 0
        %v1537 = vsel %vm1513, %v977, 0
        %1539 = vmatpush.bf16.xpose.msra.mxu0 0
        %1540 = vmatpush.bf16.xpose.msra.mxu0 0
        %1541 = vmatpush.bf16.xpose.msra.mxu0 0
        %1542 = vmatpush.bf16.xpose.msra.mxu0 0
        %1543 = vmatpush.bf16.xpose.msra.mxu0 0
        %1544 = vmatpush.bf16.xpose.msra.mxu0 0
        %1545 = vmatpush.bf16.xpose.msra.mxu0 0
        %1546 = vmatpush.bf16.xpose.msra.mxu0 %v1537
        %1547 = vmatmul.bf16.gmra.mxu0 %v1534
        %v1548 = vpop.f32.mrf.mxu0
        %v1549 = vadd.f32 0.0, %v1548
        %v1550 = vpop.f32.mrf.mxu0
        %1551 = vdwg.mxu0
        %v1553 = vsel %vm1513, %v1497, 0
        %v1556 = vsel %vm1513, %v980, 0
        %1558 = vmatpush.bf16.xpose.msra.mxu0 0
        %1559 = vmatpush.bf16.xpose.msra.mxu0 0
        %1560 = vmatpush.bf16.xpose.msra.mxu0 0
        %1561 = vmatpush.bf16.xpose.msra.mxu0 0
        %1562 = vmatpush.bf16.xpose.msra.mxu0 0
        %1563 = vmatpush.bf16.xpose.msra.mxu0 0
        %1564 = vmatpush.bf16.xpose.msra.mxu0 0
        %1565 = vmatpush.bf16.xpose.msra.mxu0 %v1556
        %1566 = vmatmul.bf16.gmra.mxu0 %v1553
        %v1567 = vpop.f32.mrf.mxu0
        %v1568 = vadd.f32 0.0, %v1567
        %v1569 = vpop.f32.mrf.mxu0
        %1570 = vdwg.mxu0
        %v1572 = vsel %vm1513, %v1500, 0
        %v1575 = vsel %vm1513, %v983, 0
        %1577 = vmatpush.bf16.xpose.msra.mxu0 0
        %1578 = vmatpush.bf16.xpose.msra.mxu0 0
        %1579 = vmatpush.bf16.xpose.msra.mxu0 0
        %1580 = vmatpush.bf16.xpose.msra.mxu0 0
        %1581 = vmatpush.bf16.xpose.msra.mxu0 0
        %1582 = vmatpush.bf16.xpose.msra.mxu0 0
        %1583 = vmatpush.bf16.xpose.msra.mxu0 0
        %1584 = vmatpush.bf16.xpose.msra.mxu0 %v1575
        %1585 = vmatmul.bf16.gmra.mxu0 %v1572
        %v1586 = vpop.f32.mrf.mxu0
        %v1587 = vadd.f32 0.0, %v1586
        %v1588 = vpop.f32.mrf.mxu0
        %1589 = vdwg.mxu0
        %v1591 = vsel %vm1513, %v1503, 0
        %v1594 = vsel %vm1513, %v986, 0
        %1596 = vmatpush.bf16.xpose.msra.mxu0 0
        %1597 = vmatpush.bf16.xpose.msra.mxu0 0
        %1598 = vmatpush.bf16.xpose.msra.mxu0 0
        %1599 = vmatpush.bf16.xpose.msra.mxu0 0
        %1600 = vmatpush.bf16.xpose.msra.mxu0 0
        %1601 = vmatpush.bf16.xpose.msra.mxu0 0
        %1602 = vmatpush.bf16.xpose.msra.mxu0 0
        %1603 = vmatpush.bf16.xpose.msra.mxu0 %v1594
        %1604 = vmatmul.bf16.gmra.mxu0 %v1591
        %v1605 = vpop.f32.mrf.mxu0
        %v1606 = vadd.f32 0.0, %v1605
        %v1607 = vpop.f32.mrf.mxu0
        %1608 = vdwg.mxu0
        %v1610 = vsel %vm1513, %v1506, 0
        %v1613 = vsel %vm1513, %v989, 0
        %1615 = vmatpush.bf16.xpose.msra.mxu0 0
        %1616 = vmatpush.bf16.xpose.msra.mxu0 0
        %1617 = vmatpush.bf16.xpose.msra.mxu0 0
        %1618 = vmatpush.bf16.xpose.msra.mxu0 0
        %1619 = vmatpush.bf16.xpose.msra.mxu0 0
        %1620 = vmatpush.bf16.xpose.msra.mxu0 0
        %1621 = vmatpush.bf16.xpose.msra.mxu0 0
        %1622 = vmatpush.bf16.xpose.msra.mxu0 %v1613
        %1623 = vmatmul.bf16.gmra.mxu0 %v1610
        %v1624 = vpop.f32.mrf.mxu0
        %v1625 = vadd.f32 0.0, %v1624
        %v1626 = vpop.f32.mrf.mxu0
        %1627 = vdwg.mxu0
        %v1629 = vsel %vm1513, %v1509, 0
        %v1632 = vsel %vm1513, %v992, 0
        %1634 = vmatpush.bf16.xpose.msra.mxu0 0
        %1635 = vmatpush.bf16.xpose.msra.mxu0 0
        %1636 = vmatpush.bf16.xpose.msra.mxu0 0
        %1637 = vmatpush.bf16.xpose.msra.mxu0 0
        %1638 = vmatpush.bf16.xpose.msra.mxu0 0
        %1639 = vmatpush.bf16.xpose.msra.mxu0 0
        %1640 = vmatpush.bf16.xpose.msra.mxu0 0
        %1641 = vmatpush.bf16.xpose.msra.mxu0 %v1632
        %1642 = vmatmul.bf16.gmra.mxu0 %v1629
        %v1643 = vpop.f32.mrf.mxu0
        %v1644 = vadd.f32 0.0, %v1643
        %v1645 = vpop.f32.mrf.mxu0
        %1646 = vdwg.mxu0
        %v1648 = vsel %vm1513, %v1512, 0
        %v1651 = vsel %vm1513, %v995, 0
        %1653 = vmatpush.bf16.xpose.msra.mxu0 0
        %1654 = vmatpush.bf16.xpose.msra.mxu0 0
        %1655 = vmatpush.bf16.xpose.msra.mxu0 0
        %1656 = vmatpush.bf16.xpose.msra.mxu0 0
        %1657 = vmatpush.bf16.xpose.msra.mxu0 0
        %1658 = vmatpush.bf16.xpose.msra.mxu0 0
        %1659 = vmatpush.bf16.xpose.msra.mxu0 0
        %1660 = vmatpush.bf16.xpose.msra.mxu0 %v1651
        %1661 = vmatmul.bf16.gmra.mxu0 %v1648
        %v1662 = vpop.f32.mrf.mxu0
        %v1663 = vadd.f32 0.0, %v1662
        %v1664 = vpop.f32.mrf.mxu0
        %1665 = vdwg.mxu0
        %v1666 = vsel %vm1513, %v1530, -inf
        %1667 = vmax.xlane.f32.xlu0 %v1666
        %v1668 = vpop.xlane.xlu0 %1667
        %v1669 = vsel %vm1513, %v1549, -inf
        %1670 = vmax.xlane.f32.xlu0 %v1669
        %v1671 = vpop.xlane.xlu0 %1670
        %v1672 = vsel %vm1513, %v1568, -inf
        %1673 = vmax.xlane.f32.xlu0 %v1672
        %v1674 = vpop.xlane.xlu0 %1673
        %v1675 = vsel %vm1513, %v1587, -inf
        %1676 = vmax.xlane.f32.xlu0 %v1675
        %v1677 = vpop.xlane.xlu0 %1676
        %v1678 = vsel %vm1513, %v1606, -inf
        %1679 = vmax.xlane.f32.xlu0 %v1678
        %v1680 = vpop.xlane.xlu0 %1679
        %v1681 = vsel %vm1513, %v1625, -inf
        %1682 = vmax.xlane.f32.xlu0 %v1681
        %v1683 = vpop.xlane.xlu0 %1682
        %v1684 = vsel %vm1513, %v1644, -inf
        %1685 = vmax.xlane.f32.xlu0 %v1684
        %v1686 = vpop.xlane.xlu0 %1685
        %v1687 = vsel %vm1513, %v1663, -inf
        %1688 = vmax.xlane.f32.xlu0 %v1687
        %v1689 = vpop.xlane.xlu0 %1688
        %v1690 = vsub.f32 %v1530, %v1668
        %v1691 = vsub.f32 %v1549, %v1671
        %v1692 = vsub.f32 %v1568, %v1674
        %v1693 = vsub.f32 %v1587, %v1677
        %v1694 = vsub.f32 %v1606, %v1680
        %v1695 = vsub.f32 %v1625, %v1683
        %v1696 = vsub.f32 %v1644, %v1686
        %v1697 = vsub.f32 %v1663, %v1689
        %v1698 = vpack.c.bf16 %v1690, %v1690
        %v1699 = vpack.c.bf16 %v1691, %v1691
        %v1700 = vpack.c.bf16 %v1692, %v1692
        %v1701 = vpack.c.bf16 %v1693, %v1693
        %v1702 = vpack.c.bf16 %v1694, %v1694
        %v1703 = vpack.c.bf16 %v1695, %v1695
        %v1704 = vpack.c.bf16 %v1696, %v1696
        %v1705 = vpack.c.bf16 %v1697, %v1697
        %v1706 = vunpack.c.l.bf16 %v1698
        %v1707 = vunpack.c.l.bf16 %v1699
        %v1708 = vunpack.c.l.bf16 %v1700
        %v1709 = vunpack.c.l.bf16 %v1701
        %v1710 = vunpack.c.l.bf16 %v1702
        %v1711 = vunpack.c.l.bf16 %v1703
        %v1712 = vunpack.c.l.bf16 %v1704
        %v1713 = vunpack.c.l.bf16 %v1705
        %v1714 = vmul.f32 %v1706, 1.442695
        %v1715 = vpow.pop %v1714
        %v1716 = vmul.f32 %v1707, 1.442695
        %v1717 = vpow.pop %v1716
        %v1718 = vmul.f32 %v1708, 1.442695
        %v1719 = vpow.pop %v1718
        %v1720 = vmul.f32 %v1709, 1.442695
        %v1721 = vpow.pop %v1720
        %v1722 = vmul.f32 %v1710, 1.442695
        %v1723 = vpow.pop %v1722
        %v1724 = vmul.f32 %v1711, 1.442695
        %v1725 = vpow.pop %v1724
        %v1726 = vmul.f32 %v1712, 1.442695
        %v1727 = vpow.pop %v1726
        %v1728 = vmul.f32 %v1713, 1.442695
        %v1729 = vpow.pop %v1728
        %v1730 = vpack.c.bf16 %v1715, %v1715
        %v1731 = vpack.c.bf16 %v1717, %v1717
        %v1732 = vpack.c.bf16 %v1719, %v1719
        %v1733 = vpack.c.bf16 %v1721, %v1721
        %v1734 = vpack.c.bf16 %v1723, %v1723
        %v1735 = vpack.c.bf16 %v1725, %v1725
        %v1736 = vpack.c.bf16 %v1727, %v1727
        %v1737 = vpack.c.bf16 %v1729, %v1729
        %v1738 = vunpack.c.l.bf16 %v1730
        %v1739 = vunpack.c.l.bf16 %v1731
        %v1740 = vunpack.c.l.bf16 %v1732
        %v1741 = vunpack.c.l.bf16 %v1733
        %v1742 = vunpack.c.l.bf16 %v1734
        %v1743 = vunpack.c.l.bf16 %v1735
        %v1744 = vunpack.c.l.bf16 %v1736
        %v1745 = vunpack.c.l.bf16 %v1737
        %v1746 = vsel %vm1513, %v1738, 0.0
        %1747 = vadd.xlane.f32.xlu0 %v1746
        %v1748 = vpop.xlane.xlu0 %1747
        %v1749 = vsel %vm1513, %v1739, 0.0
        %1750 = vadd.xlane.f32.xlu0 %v1749
        %v1751 = vpop.xlane.xlu0 %1750
        %v1752 = vsel %vm1513, %v1740, 0.0
        %1753 = vadd.xlane.f32.xlu0 %v1752
        %v1754 = vpop.xlane.xlu0 %1753
        %v1755 = vsel %vm1513, %v1741, 0.0
        %1756 = vadd.xlane.f32.xlu0 %v1755
        %v1757 = vpop.xlane.xlu0 %1756
        %v1758 = vsel %vm1513, %v1742, 0.0
        %1759 = vadd.xlane.f32.xlu0 %v1758
        %v1760 = vpop.xlane.xlu0 %1759
        %v1761 = vsel %vm1513, %v1743, 0.0
        %1762 = vadd.xlane.f32.xlu0 %v1761
        %v1763 = vpop.xlane.xlu0 %1762
        %v1764 = vsel %vm1513, %v1744, 0.0
        %1765 = vadd.xlane.f32.xlu0 %v1764
        %v1766 = vpop.xlane.xlu0 %1765
        %v1767 = vsel %vm1513, %v1745, 0.0
        %1768 = vadd.xlane.f32.xlu0 %v1767
        %v1769 = vpop.xlane.xlu0 %1768
        %v1771 = vsel %vm1513, %v1730, 0
        %vm1773 = vcmask 1043456
        %v1775 = vsel %vm1773, %v1218, 0
        %1777 = vmatpush.bf16.msra.mxu0 0
        %1778 = vmatpush.bf16.msra.mxu0 0
        %1779 = vmatpush.bf16.msra.mxu0 0
        %1780 = vmatpush.bf16.msra.mxu0 0
        %1781 = vmatpush.bf16.msra.mxu0 0
        %1782 = vmatpush.bf16.msra.mxu0 0
        %1783 = vmatpush.bf16.msra.mxu0 0
        %1784 = vmatpush.bf16.msra.mxu0 %v1775
        %1785 = vmatmul.bf16.gmra.mxu0 %v1771
        %v1786 = vpop.f32.mrf.mxu0
        %v1787 = vadd.f32 0.0, %v1786
        %v1788 = vpop.f32.mrf.mxu0
        %1789 = vdwg.mxu0
        %v1791 = vsel %vm1513, %v1731, 0
        %v1794 = vsel %vm1773, %v1221, 0
        %1796 = vmatpush.bf16.msra.mxu0 0
        %1797 = vmatpush.bf16.msra.mxu0 0
        %1798 = vmatpush.bf16.msra.mxu0 0
        %1799 = vmatpush.bf16.msra.mxu0 0
        %1800 = vmatpush.bf16.msra.mxu0 0
        %1801 = vmatpush.bf16.msra.mxu0 0
        %1802 = vmatpush.bf16.msra.mxu0 0
        %1803 = vmatpush.bf16.msra.mxu0 %v1794
        %1804 = vmatmul.bf16.gmra.mxu0 %v1791
        %v1805 = vpop.f32.mrf.mxu0
        %v1806 = vadd.f32 0.0, %v1805
        %v1807 = vpop.f32.mrf.mxu0
        %1808 = vdwg.mxu0
        %v1810 = vsel %vm1513, %v1732, 0
        %v1813 = vsel %vm1773, %v1224, 0
        %1815 = vmatpush.bf16.msra.mxu0 0
        %1816 = vmatpush.bf16.msra.mxu0 0
        %1817 = vmatpush.bf16.msra.mxu0 0
        %1818 = vmatpush.bf16.msra.mxu0 0
        %1819 = vmatpush.bf16.msra.mxu0 0
        %1820 = vmatpush.bf16.msra.mxu0 0
        %1821 = vmatpush.bf16.msra.mxu0 0
        %1822 = vmatpush.bf16.msra.mxu0 %v1813
        %1823 = vmatmul.bf16.gmra.mxu0 %v1810
        %v1824 = vpop.f32.mrf.mxu0
        %v1825 = vadd.f32 0.0, %v1824
        %v1826 = vpop.f32.mrf.mxu0
        %1827 = vdwg.mxu0
        %v1829 = vsel %vm1513, %v1733, 0
        %v1832 = vsel %vm1773, %v1227, 0
        %1834 = vmatpush.bf16.msra.mxu0 0
        %1835 = vmatpush.bf16.msra.mxu0 0
        %1836 = vmatpush.bf16.msra.mxu0 0
        %1837 = vmatpush.bf16.msra.mxu0 0
        %1838 = vmatpush.bf16.msra.mxu0 0
        %1839 = vmatpush.bf16.msra.mxu0 0
        %1840 = vmatpush.bf16.msra.mxu0 0
        %1841 = vmatpush.bf16.msra.mxu0 %v1832
        %1842 = vmatmul.bf16.gmra.mxu0 %v1829
        %v1843 = vpop.f32.mrf.mxu0
        %v1844 = vadd.f32 0.0, %v1843
        %v1845 = vpop.f32.mrf.mxu0
        %1846 = vdwg.mxu0
        %v1848 = vsel %vm1513, %v1734, 0
        %v1851 = vsel %vm1773, %v1230, 0
        %1853 = vmatpush.bf16.msra.mxu0 0
        %1854 = vmatpush.bf16.msra.mxu0 0
        %1855 = vmatpush.bf16.msra.mxu0 0
        %1856 = vmatpush.bf16.msra.mxu0 0
        %1857 = vmatpush.bf16.msra.mxu0 0
        %1858 = vmatpush.bf16.msra.mxu0 0
        %1859 = vmatpush.bf16.msra.mxu0 0
        %1860 = vmatpush.bf16.msra.mxu0 %v1851
        %1861 = vmatmul.bf16.gmra.mxu0 %v1848
        %v1862 = vpop.f32.mrf.mxu0
        %v1863 = vadd.f32 0.0, %v1862
        %v1864 = vpop.f32.mrf.mxu0
        %1865 = vdwg.mxu0
        %v1867 = vsel %vm1513, %v1735, 0
        %v1870 = vsel %vm1773, %v1233, 0
        %1872 = vmatpush.bf16.msra.mxu0 0
        %1873 = vmatpush.bf16.msra.mxu0 0
        %1874 = vmatpush.bf16.msra.mxu0 0
        %1875 = vmatpush.bf16.msra.mxu0 0
        %1876 = vmatpush.bf16.msra.mxu0 0
        %1877 = vmatpush.bf16.msra.mxu0 0
        %1878 = vmatpush.bf16.msra.mxu0 0
        %1879 = vmatpush.bf16.msra.mxu0 %v1870
        %1880 = vmatmul.bf16.gmra.mxu0 %v1867
        %v1881 = vpop.f32.mrf.mxu0
        %v1882 = vadd.f32 0.0, %v1881
        %v1883 = vpop.f32.mrf.mxu0
        %1884 = vdwg.mxu0
        %v1886 = vsel %vm1513, %v1736, 0
        %v1889 = vsel %vm1773, %v1236, 0
        %1891 = vmatpush.bf16.msra.mxu0 0
        %1892 = vmatpush.bf16.msra.mxu0 0
        %1893 = vmatpush.bf16.msra.mxu0 0
        %1894 = vmatpush.bf16.msra.mxu0 0
        %1895 = vmatpush.bf16.msra.mxu0 0
        %1896 = vmatpush.bf16.msra.mxu0 0
        %1897 = vmatpush.bf16.msra.mxu0 0
        %1898 = vmatpush.bf16.msra.mxu0 %v1889
        %1899 = vmatmul.bf16.gmra.mxu0 %v1886
        %v1900 = vpop.f32.mrf.mxu0
        %v1901 = vadd.f32 0.0, %v1900
        %v1902 = vpop.f32.mrf.mxu0
        %1903 = vdwg.mxu0
        %v1905 = vsel %vm1513, %v1737, 0
        %v1908 = vsel %vm1773, %v1239, 0
        %1910 = vmatpush.bf16.msra.mxu0 0
        %1911 = vmatpush.bf16.msra.mxu0 0
        %1912 = vmatpush.bf16.msra.mxu0 0
        %1913 = vmatpush.bf16.msra.mxu0 0
        %1914 = vmatpush.bf16.msra.mxu0 0
        %1915 = vmatpush.bf16.msra.mxu0 0
        %1916 = vmatpush.bf16.msra.mxu0 0
        %1917 = vmatpush.bf16.msra.mxu0 %v1908
        %1918 = vmatmul.bf16.gmra.mxu0 %v1905
        %v1919 = vpop.f32.mrf.mxu0
        %v1920 = vadd.f32 0.0, %v1919
        %v1921 = vpop.f32.mrf.mxu0
        %1922 = vdwg.mxu0
        %v1923 = vrcp.pop %v1748
        %v1924 = vrcp.pop %v1751
        %v1925 = vrcp.pop %v1754
        %v1926 = vrcp.pop %v1757
        %v1927 = vrcp.pop %v1760
        %v1928 = vrcp.pop %v1763
        %v1929 = vrcp.pop %v1766
        %v1930 = vrcp.pop %v1769
        %v1931 = vmul.f32 %v1787, %v1923
        %v1932 = vmul.f32 %v1806, %v1924
        %v1933 = vmul.f32 %v1825, %v1925
        %v1934 = vmul.f32 %v1844, %v1926
        %v1935 = vmul.f32 %v1863, %v1927
        %v1936 = vmul.f32 %v1882, %v1928
        %v1937 = vmul.f32 %v1901, %v1929
        %v1938 = vmul.f32 %v1920, %v1930
        %v1939 = vrot.slane %v1933, 4
        %vm1940 = vcmask 1047556
        %v1941 = vsel %vm1940, %v1939, %v1931
        %v1942 = vrot.slane %v1931, 4
        %v1943 = vsel %vm1940, %v1933, %v1942
        %v1945 = vunpack.c.l.s4 1983009808
        %v1946 = vunpack.c.0.s8 %v1945
        %v1947 = vperm.slane %v1941, %v1946
        %v1949 = vunpack.c.l.s4 1983009808
        %v1950 = vunpack.c.0.s8 %v1949
        %v1951 = vperm.slane %v1943, %v1950
        %v1952 = vrot.slane %v1934, 4
        %v1953 = vsel %vm1940, %v1952, %v1932
        %v1954 = vrot.slane %v1932, 4
        %v1955 = vsel %vm1940, %v1934, %v1954
        %v1957 = vunpack.c.l.s4 1983009808
        %v1958 = vunpack.c.0.s8 %v1957
        %v1959 = vperm.slane %v1953, %v1958
        %v1961 = vunpack.c.l.s4 1983009808
        %v1962 = vunpack.c.0.s8 %v1961
        %v1963 = vperm.slane %v1955, %v1962
        %v1964 = vrot.slane %v1959, 4
        %v1965 = vsel %vm1940, %v1964, %v1947
        %v1966 = vrot.slane %v1947, 4
        %v1967 = vsel %vm1940, %v1959, %v1966
        %v1969 = vunpack.c.l.s4 1934713408
        %v1970 = vunpack.c.0.s8 %v1969
        %v1971 = vperm.slane %v1965, %v1970
        %v1973 = vunpack.c.l.s4 1934713408
        %v1974 = vunpack.c.0.s8 %v1973
        %v1975 = vperm.slane %v1967, %v1974
        %v1976 = vrot.slane %v1963, 4
        %v1977 = vsel %vm1940, %v1976, %v1951
        %v1978 = vrot.slane %v1951, 4
        %v1979 = vsel %vm1940, %v1963, %v1978
        %v1981 = vunpack.c.l.s4 1934713408
        %v1982 = vunpack.c.0.s8 %v1981
        %v1983 = vperm.slane %v1977, %v1982
        %v1985 = vunpack.c.l.s4 1934713408
        %v1986 = vunpack.c.0.s8 %v1985
        %v1987 = vperm.slane %v1979, %v1986
        %v1988 = vrot.slane %v1971, 4
        %v1989 = vsel %vm1940, 0.0, %v1988
        %v1990 = vrot.slane %v1975, 4
        %v1991 = vsel %vm1940, 0.0, %v1990
        %v1992 = vrot.slane %v1983, 4
        %v1993 = vsel %vm1940, 0.0, %v1992
        %v1994 = vrot.slane %v1987, 4
        %v1995 = vsel %vm1940, 0.0, %v1994
        %v1996 = vrot.slane %v1937, 4
        %v1997 = vsel %vm1940, %v1996, %v1935
        %v1998 = vrot.slane %v1935, 4
        %v1999 = vsel %vm1940, %v1937, %v1998
        %v2001 = vunpack.c.l.s4 1983009808
        %v2002 = vunpack.c.0.s8 %v2001
        %v2003 = vperm.slane %v1997, %v2002
        %v2005 = vunpack.c.l.s4 1983009808
        %v2006 = vunpack.c.0.s8 %v2005
        %v2007 = vperm.slane %v1999, %v2006
        %v2008 = vrot.slane %v1938, 4
        %v2009 = vsel %vm1940, %v2008, %v1936
        %v2010 = vrot.slane %v1936, 4
        %v2011 = vsel %vm1940, %v1938, %v2010
        %v2013 = vunpack.c.l.s4 1983009808
        %v2014 = vunpack.c.0.s8 %v2013
        %v2015 = vperm.slane %v2009, %v2014
        %v2017 = vunpack.c.l.s4 1983009808
        %v2018 = vunpack.c.0.s8 %v2017
        %v2019 = vperm.slane %v2011, %v2018
        %v2020 = vrot.slane %v2015, 4
        %v2021 = vsel %vm1940, %v2020, %v2003
        %v2022 = vrot.slane %v2003, 4
        %v2023 = vsel %vm1940, %v2015, %v2022
        %v2025 = vunpack.c.l.s4 1934713408
        %v2026 = vunpack.c.0.s8 %v2025
        %v2027 = vperm.slane %v2021, %v2026
        %v2029 = vunpack.c.l.s4 1934713408
        %v2030 = vunpack.c.0.s8 %v2029
        %v2031 = vperm.slane %v2023, %v2030
        %v2032 = vrot.slane %v2019, 4
        %v2033 = vsel %vm1940, %v2032, %v2007
        %v2034 = vrot.slane %v2007, 4
        %v2035 = vsel %vm1940, %v2019, %v2034
        %v2037 = vunpack.c.l.s4 1934713408
        %v2038 = vunpack.c.0.s8 %v2037
        %v2039 = vperm.slane %v2033, %v2038
        %v2041 = vunpack.c.l.s4 1934713408
        %v2042 = vunpack.c.0.s8 %v2041
        %v2043 = vperm.slane %v2035, %v2042
        %v2044 = vrot.slane %v2027, 4
        %v2045 = vsel %vm1940, 0.0, %v2044
        %v2046 = vrot.slane %v2031, 4
        %v2047 = vsel %vm1940, 0.0, %v2046
        %v2048 = vrot.slane %v2039, 4
        %v2049 = vsel %vm1940, 0.0, %v2048
        %v2050 = vrot.slane %v2043, 4
        %v2051 = vsel %vm1940, 0.0, %v2050
        %v2052 = vsel %vm1940, %v1990, %v1971
        %v2054 = vunpack.c.l.s4 1983009808
        %v2055 = vunpack.c.0.s8 %v2054
        %v2056 = vperm.slane %v2052, %v2055
        %v2057 = vrot.slane %v1991, 4
        %v2058 = vsel %vm1940, %v2057, %v1989
        %v2060 = vunpack.c.l.s4 1983009808
        %v2061 = vunpack.c.0.s8 %v2060
        %v2062 = vperm.slane %v2058, %v2061
        %v2063 = vsel %vm1940, %v1994, %v1983
        %v2065 = vunpack.c.l.s4 1983009808
        %v2066 = vunpack.c.0.s8 %v2065
        %v2067 = vperm.slane %v2063, %v2066
        %v2068 = vrot.slane %v1995, 4
        %v2069 = vsel %vm1940, %v2068, %v1993
        %v2071 = vunpack.c.l.s4 1983009808
        %v2072 = vunpack.c.0.s8 %v2071
        %v2073 = vperm.slane %v2069, %v2072
        %v2074 = vrot.slane %v2062, 4
        %v2075 = vsel %vm1940, %v2074, %v2056
        %v2076 = vrot.slane %v2056, 4
        %v2077 = vsel %vm1940, %v2062, %v2076
        %v2079 = vunpack.c.l.s4 1934713408
        %v2080 = vunpack.c.0.s8 %v2079
        %v2081 = vperm.slane %v2075, %v2080
        %v2083 = vunpack.c.l.s4 1934713408
        %v2084 = vunpack.c.0.s8 %v2083
        %v2085 = vperm.slane %v2077, %v2084
        %v2086 = vrot.slane %v2073, 4
        %v2087 = vsel %vm1940, %v2086, %v2067
        %v2088 = vrot.slane %v2067, 4
        %v2089 = vsel %vm1940, %v2073, %v2088
        %v2091 = vunpack.c.l.s4 1934713408
        %v2092 = vunpack.c.0.s8 %v2091
        %v2093 = vperm.slane %v2087, %v2092
        %v2095 = vunpack.c.l.s4 1934713408
        %v2096 = vunpack.c.0.s8 %v2095
        %v2097 = vperm.slane %v2089, %v2096
        %v2098 = vrot.slane %v2093, 4
        %v2099 = vsel %vm1940, %v2098, %v2081
        %v2100 = vrot.slane %v2081, 4
        %v2101 = vsel %vm1940, %v2093, %v2100
        %v2102 = vrot.slane %v2097, 4
        %v2103 = vsel %vm1940, %v2102, %v2085
        %v2104 = vrot.slane %v2085, 4
        %v2105 = vsel %vm1940, %v2097, %v2104
        %v2106 = vsel %vm1940, %v2046, %v2027
        %v2108 = vunpack.c.l.s4 1983009808
        %v2109 = vunpack.c.0.s8 %v2108
        %v2110 = vperm.slane %v2106, %v2109
        %v2111 = vrot.slane %v2047, 4
        %v2112 = vsel %vm1940, %v2111, %v2045
        %v2114 = vunpack.c.l.s4 1983009808
        %v2115 = vunpack.c.0.s8 %v2114
        %v2116 = vperm.slane %v2112, %v2115
        %v2117 = vsel %vm1940, %v2050, %v2039
        %v2119 = vunpack.c.l.s4 1983009808
        %v2120 = vunpack.c.0.s8 %v2119
        %v2121 = vperm.slane %v2117, %v2120
        %v2122 = vrot.slane %v2051, 4
        %v2123 = vsel %vm1940, %v2122, %v2049
        %v2125 = vunpack.c.l.s4 1983009808
        %v2126 = vunpack.c.0.s8 %v2125
        %v2127 = vperm.slane %v2123, %v2126
        %v2128 = vrot.slane %v2116, 4
        %v2129 = vsel %vm1940, %v2128, %v2110
        %v2130 = vrot.slane %v2110, 4
        %v2131 = vsel %vm1940, %v2116, %v2130
        %v2133 = vunpack.c.l.s4 1934713408
        %v2134 = vunpack.c.0.s8 %v2133
        %v2135 = vperm.slane %v2129, %v2134
        %v2137 = vunpack.c.l.s4 1934713408
        %v2138 = vunpack.c.0.s8 %v2137
        %v2139 = vperm.slane %v2131, %v2138
        %v2140 = vrot.slane %v2127, 4
        %v2141 = vsel %vm1940, %v2140, %v2121
        %v2142 = vrot.slane %v2121, 4
        %v2143 = vsel %vm1940, %v2127, %v2142
        %v2145 = vunpack.c.l.s4 1934713408
        %v2146 = vunpack.c.0.s8 %v2145
        %v2147 = vperm.slane %v2141, %v2146
        %v2149 = vunpack.c.l.s4 1934713408
        %v2150 = vunpack.c.0.s8 %v2149
        %v2151 = vperm.slane %v2143, %v2150
        %v2152 = vrot.slane %v2147, 4
        %v2153 = vsel %vm1940, %v2152, %v2135
        %v2154 = vrot.slane %v2135, 4
        %v2155 = vsel %vm1940, %v2147, %v2154
        %v2156 = vrot.slane %v2151, 4
        %v2157 = vsel %vm1940, %v2156, %v2139
        %v2158 = vrot.slane %v2139, 4
        %v2159 = vsel %vm1940, %v2151, %v2158
        %2162 = vrot.lane.b32.xlu0 %v2101, 8
        %v2163 = vpop.permute.xlu0 %2162
        %2164 = vrot.lane.b32.xlu0 %v2155, 8
        %v2165 = vpop.permute.xlu0 %2164
        %2170 = vrot.lane.b32.xlu0 %v2103, 16
        %v2171 = vpop.permute.xlu0 %2170
        %2172 = vrot.lane.b32.xlu0 %v2157, 16
        %v2173 = vpop.permute.xlu0 %2172
        %2178 = vrot.lane.b32.xlu0 %v2105, 24
        %v2179 = vpop.permute.xlu0 %2178
        %2180 = vrot.lane.b32.xlu0 %v2159, 24
        %v2181 = vpop.permute.xlu0 %2180
        %v2184 = vsel %vm1513, %v2099, %v2163
        %v2185 = vsel %vm1513, %v2153, %v2165
        %vm2186 = vcmask 130048
        %v2187 = vsel %vm2186, %v2184, %v2171
        %v2188 = vsel %vm2186, %v2185, %v2173
        %vm2189 = vcmask 195584
        %v2190 = vsel %vm2189, %v2187, %v2179
        %v2191 = vsel %vm2189, %v2188, %v2181
        %v2192 = vpack.c.bf16 %v2191, %v2190
        %v2193 = vperm.slane %v667, 3
        %v2198 = vunpack.c.l.b16 %v651
        %v2199 = vunpack.c.l.b16 %v652
        %v2200 = vunpack.c.l.b16 %v653
        %v2201 = vunpack.c.l.b16 %v654
        %v2202 = vpack.c.b16 %v2199, %v2198
        %v2203 = vpack.c.b16 %v2201, %v2200
        %v2207 = vsel %vm698, %v2192, 0
        %2209 = vmatpush.bf16.msra.mxu0 0
        %2210 = vmatpush.bf16.msra.mxu0 0
        %2211 = vmatpush.bf16.msra.mxu0 0
        %2212 = vmatpush.bf16.msra.mxu0 0
        %2213 = vmatpush.bf16.msra.mxu0 0
        %2214 = vmatpush.bf16.msra.mxu0 0
        %2215 = vmatpush.bf16.msra.mxu0 %v2203
        %2216 = vmatpush.bf16.msra.mxu0 %v2202
        %2217 = vmatmul.bf16.gmra.mxu0 %v2207
        %v2218 = vpop.f32.mrf.mxu0
        %v2219 = vadd.f32 %v2193, %v2218
        %v2220 = vpop.f32.mrf.mxu0
        %v2221 = vadd.f32 %v2193, %v2220
        %2222 = vdwg.mxu0
        %v2223 = vadd.f32 %v670, %v2219
        %v2224 = vadd.f32 %v671, %v2221
        %v2225 = vsel %vm698, %v2223, 0.0
        %2226 = vadd.xlane.f32.xlu0 %v2225
        %v2227 = vpop.xlane.xlu0 %2226
        %v2228 = vsel %vm698, %v2224, 0.0
        %2229 = vadd.xlane.f32.xlu0 %v2228
        %v2230 = vpop.xlane.xlu0 %2229
        %v2231 = vrcp.pop 32.0
        %v2232 = vmul.f32 32.0, %v2231
        %v2233 = vsub.f32 1.0, %v2232
        %v2234 = vmul.f32 %v2231, %v2233
        %v2235 = vadd.f32 %v2231, %v2234
        %vm2236 = vweird.f32 %v2231
        %v2237 = vsel %vm2236, %v2231, %v2235
        %v2238 = vmul.f32 %v2227, %v2237
        %v2239 = vmul.f32 %v2230, %v2237
        %v2240 = vsub.f32 %v2223, %v2238
        %v2241 = vsub.f32 %v2224, %v2239
        %v2242 = vmul.f32 %v2240, %v2240
        %v2243 = vmul.f32 %v2241, %v2241
        %v2244 = vsel %vm698, %v2242, 0.0
        %2245 = vadd.xlane.f32.xlu0 %v2244
        %v2246 = vpop.xlane.xlu0 %2245
        %v2247 = vsel %vm698, %v2243, 0.0
        %2248 = vadd.xlane.f32.xlu0 %v2247
        %v2249 = vpop.xlane.xlu0 %2248
        %v2250 = vmul.f32 %v2246, %v2237
        %v2251 = vmul.f32 %v2249, %v2237
        %v2252 = vadd.f32 %v2250, 1e-05
        %v2253 = vadd.f32 %v2251, 1e-05
        %v2254 = vrsqrt.pop %v2252
        %v2255 = vmul.f32 %v2254, %v2252
        %v2256 = vmul.f32 %v2255, %v2254
        %v2257 = vmul.f32 0.5, %v2256
        %v2258 = vsub.f32 1.5, %v2257
        %v2259 = vmul.f32 %v2254, %v2258
        %vm2260 = vweird.f32 %v2252
        %vm2261 = vweird.f32 %v2254
        %vm2262 = vmor %vm2260, %vm2261
        %v2263 = vsel %vm2262, %v2254, %v2259
        %v2264 = vrsqrt.pop %v2253
        %v2265 = vmul.f32 %v2264, %v2253
        %v2266 = vmul.f32 %v2265, %v2264
        %v2267 = vmul.f32 0.5, %v2266
        %v2268 = vsub.f32 1.5, %v2267
        %v2269 = vmul.f32 %v2264, %v2268
        %vm2270 = vweird.f32 %v2253
        %vm2271 = vweird.f32 %v2264
        %vm2272 = vmor %vm2270, %vm2271
        %v2273 = vsel %vm2272, %v2264, %v2269
        %v2274 = vmul.f32 %v2240, %v2263
        %v2275 = vmul.f32 %v2241, %v2273
        %v2276 = vperm.slane %v667, 4
        %v2277 = vmul.f32 %v2274, %v2276
        %v2278 = vmul.f32 %v2275, %v2276
        %v2279 = vperm.slane %v667, 5
        %v2280 = vadd.f32 %v2277, %v2279
        %v2281 = vadd.f32 %v2278, %v2279
        %v2282 = vpack.c.bf16 %v2281, %v2280
        %v2283 = vperm.slane %v669, 0
        %v2288 = vunpack.c.l.b16 %v655
        %v2289 = vunpack.c.l.b16 %v656
        %v2290 = vunpack.c.l.b16 %v657
        %v2291 = vunpack.c.l.b16 %v658
        %v2292 = vpack.c.b16 %v2289, %v2288
        %v2293 = vpack.c.b16 %v2291, %v2290
        %v2297 = vsel %vm698, %v2282, 0
        %2299 = vmatpush.bf16.msra.mxu0 0
        %2300 = vmatpush.bf16.msra.mxu0 0
        %2301 = vmatpush.bf16.msra.mxu0 0
        %2302 = vmatpush.bf16.msra.mxu0 0
        %2303 = vmatpush.bf16.msra.mxu0 0
        %2304 = vmatpush.bf16.msra.mxu0 0
        %2305 = vmatpush.bf16.msra.mxu0 %v2293
        %2306 = vmatpush.bf16.msra.mxu0 %v2292
        %2307 = vmatmul.bf16.gmra.mxu0 %v2297
        %v2308 = vpop.f32.mrf.mxu0
        %v2309 = vadd.f32 %v2283, %v2308
        %v2310 = vpop.f32.mrf.mxu0
        %v2311 = vadd.f32 %v2283, %v2310
        %2312 = vdwg.mxu0
        %v2313 = vmax.f32 %v2309, 0.0
        %v2314 = vmax.f32 %v2311, 0.0
        %v2315 = vpack.c.bf16 %v2314, %v2313
        %v2316 = vperm.slane %v667, 6
        %v2325 = vunpack.c.l.b16 %v659
        %v2326 = vunpack.c.l.b16 %v660
        %v2327 = vunpack.c.l.b16 %v661
        %v2328 = vunpack.c.l.b16 %v662
        %v2329 = vunpack.c.l.b16 %v663
        %v2330 = vunpack.c.l.b16 %v664
        %v2331 = vunpack.c.l.b16 %v665
        %v2332 = vunpack.c.l.b16 %v666
        %v2333 = vpack.c.b16 %v2326, %v2325
        %v2334 = vpack.c.b16 %v2328, %v2327
        %v2335 = vpack.c.b16 %v2330, %v2329
        %v2336 = vpack.c.b16 %v2332, %v2331
        %vm2341 = vcmask 523264
        %v2343 = vsel %vm2341, %v2315, 0
        %2345 = vmatpush.bf16.msra.mxu0 0
        %2346 = vmatpush.bf16.msra.mxu0 0
        %2347 = vmatpush.bf16.msra.mxu0 0
        %2348 = vmatpush.bf16.msra.mxu0 0
        %2349 = vmatpush.bf16.msra.mxu0 %v2336
        %2350 = vmatpush.bf16.msra.mxu0 %v2335
        %2351 = vmatpush.bf16.msra.mxu0 %v2334
        %2352 = vmatpush.bf16.msra.mxu0 %v2333
        %2353 = vmatmul.bf16.gmra.mxu0 %v2343
        %v2354 = vpop.f32.mrf.mxu0
        %v2355 = vadd.f32 %v2316, %v2354
        %v2356 = vpop.f32.mrf.mxu0
        %v2357 = vadd.f32 %v2316, %v2356
        %2358 = vdwg.mxu0
        %v2359 = vadd.f32 %v2280, %v2355
        %v2360 = vadd.f32 %v2281, %v2357
        %v2361 = vsel %vm698, %v2359, 0.0
        %2362 = vadd.xlane.f32.xlu0 %v2361
        %v2363 = vpop.xlane.xlu0 %2362
        %v2364 = vsel %vm698, %v2360, 0.0
        %2365 = vadd.xlane.f32.xlu0 %v2364
        %v2366 = vpop.xlane.xlu0 %2365
        %v2367 = vmul.f32 %v2363, %v2237
        %v2368 = vmul.f32 %v2366, %v2237
        %v2369 = vsub.f32 %v2359, %v2367
        %v2370 = vsub.f32 %v2360, %v2368
        %v2371 = vmul.f32 %v2369, %v2369
        %v2372 = vmul.f32 %v2370, %v2370
        %v2373 = vsel %vm698, %v2371, 0.0
        %2374 = vadd.xlane.f32.xlu0 %v2373
        %v2375 = vpop.xlane.xlu0 %2374
        %v2376 = vsel %vm698, %v2372, 0.0
        %2377 = vadd.xlane.f32.xlu0 %v2376
        %v2378 = vpop.xlane.xlu0 %2377
        %v2379 = vmul.f32 %v2375, %v2237
        %v2380 = vmul.f32 %v2378, %v2237
        %v2381 = vadd.f32 %v2379, 1e-05
        %v2382 = vadd.f32 %v2380, 1e-05
        %v2383 = vrsqrt.pop %v2381
        %v2384 = vmul.f32 %v2383, %v2381
        %v2385 = vmul.f32 %v2384, %v2383
        %v2386 = vmul.f32 0.5, %v2385
        %v2387 = vsub.f32 1.5, %v2386
        %v2388 = vmul.f32 %v2383, %v2387
        %vm2389 = vweird.f32 %v2381
        %vm2390 = vweird.f32 %v2383
        %vm2391 = vmor %vm2389, %vm2390
        %v2392 = vsel %vm2391, %v2383, %v2388
        %v2393 = vrsqrt.pop %v2382
        %v2394 = vmul.f32 %v2393, %v2382
        %v2395 = vmul.f32 %v2394, %v2393
        %v2396 = vmul.f32 0.5, %v2395
        %v2397 = vsub.f32 1.5, %v2396
        %v2398 = vmul.f32 %v2393, %v2397
        %vm2399 = vweird.f32 %v2382
        %vm2400 = vweird.f32 %v2393
        %vm2401 = vmor %vm2399, %vm2400
        %v2402 = vsel %vm2401, %v2393, %v2398
        %v2403 = vmul.f32 %v2369, %v2392
        %v2404 = vmul.f32 %v2370, %v2402
        %v2405 = vperm.slane %v667, 7
        %v2406 = vmul.f32 %v2403, %v2405
        %v2407 = vmul.f32 %v2404, %v2405
        %v2408 = vperm.slane %v668, 0
        %v2409 = vadd.f32 %v2406, %v2408
        %v2410 = vadd.f32 %v2407, %v2408
        %2411 = vst.msk [vmem:[#allocation2] sm:$0xff] %vm698, %v2409
        %2412 = vst.msk [vmem:[#allocation2 + $0x8] sm:$0xff] %vm698, %v2410
        %p2413 = scmp.eq.s32.totalorder %s29, 1
        // Predicated region
        $region89: #{tpu_custom_call.1} parent=59 // pred_check
          %p2414 = pneg %p2413
        $region90: #{tpu_custom_call.1} parent=59 // pred_check_branch
          %2416 = sbr.rel (%p2414) target = $region92
        $region91: #{tpu_custom_call.1} parent=59 // pred_region
          %v2417 = vld [vmem:[#allocation2] sm:$0xff]
          %v2418 = vld [vmem:[#allocation2 + $0x8] sm:$0xff]
          %2419 = vst.msk [vmem:[#allocation12] sm:$0xff] %vm698, %v2417
          %2420 = vst.msk [vmem:[#allocation12 + $0x8] sm:$0xff] %vm698, %v2418
        $region92: #{tpu_custom_call.1} parent=59 // pred_fallthru
          _
        // Predicated region
        $region93: #{tpu_custom_call.1} parent=59 // pred_check
          %p2421 = pneg %p314
        $region94: #{tpu_custom_call.1} parent=59 // pred_check_branch
          %2423 = sbr.rel (%p2421) target = $region96
        $region95: #{tpu_custom_call.1} parent=59 // pred_region
          %s2424 = smul.u32 2, %s28
          %2426 = vsyncadd [#allocation5], 0
          %s2427 = smul.addr %s2424, 8
          %s2428 = scalar_lea.hbm %s10, %s2427
          %s2429 = sshll.u32 [#allocation12], 4
          %s2430 = int_to_ptr.vmem [resolvable:$true] %s2429
          %s2431 = sshll.u32 %s2428, 4
          %s2432 = int_to_ptr.hbm [resolvable:$true] %s2431
          %2437 = dma.vmem_to_hbm [thread:$0]  %s2430, 256, %s2432, [#allocation5], 128, 128, 8
        $region96: #{tpu_custom_call.1} parent=59 // pred_fallthru
          _
        // Predicated region
        $region97: #{tpu_custom_call.1} parent=59 // pred_check
          %p2438 = pneg %p314
        $region98: #{tpu_custom_call.1} parent=59 // pred_check_branch
          %2440 = sbr.rel (%p2438) target = $region100
        $region99: #{tpu_custom_call.1} parent=59 // pred_region
          %2442 = dma.done [#allocation5], 256
        $region100: #{tpu_custom_call.1} parent=59 // pred_fallthru
          _
      $region60: #{tpu_custom_call.1} parent=5 // pred_fallthru
        _
      %p2443 = scmp.le.s32.totalorder 2, %s19
      // Predicated region
      $region101: #{tpu_custom_call.1} parent=5 // pred_check
        %p2444 = pneg %p2443
      $region102: #{tpu_custom_call.1} parent=5 // pred_check_branch
        %2446 = sbr.rel (%p2444) target = $region104
      $region103: #{tpu_custom_call.1} parent=5 // pred_region
        %s2447 = ssub.s32 %s19, 2
      $region104: #{tpu_custom_call.1} parent=5 // pred_fallthru
        _
    $region6: #{tpu_custom_call.1} parent=1 // loop_footer
      %s23 = sadd.s32 1, %s19
    $region7: #{tpu_custom_call.1} parent=1 // loop_footer_branch
      %18 = sbr.rel target = $region3
    $region8: #{tpu_custom_call.1} parent=1 // loop_exit
      _
    %2448 = vsyncpa [#allocation4], 1
    %s2449 = scalar_lea.sflag [#allocation4], 1
    %2450 = vsyncpa %s2449, 1
    %2451 = vsyncpa [#allocation7], 1
    %2452 = vsyncpa [#allocation5], 1
    %s2453 = scalar_lea.sflag [#allocation5], 1
    %2454 = vsyncpa %s2453, 1

</llo_original>
